<compile_context>
chip_gen: v6e
topology: v6e:2x2x1
jax: 0.10.0
libtpu: 0.0.40
codegen_flags: <defaults>
</compile_context>

<pallas_src>
import functools
import math

import jax
import jax.numpy as jnp
import numpy as np
from jax.experimental import pallas as pl
from jax.experimental.pallas import tpu as pltpu

# --- ORCA "Dynamic" model constants (deterministic, in-script) ---------------
LF, LR = 0.029, 0.033          # front / rear axle distance
MASS, IZ = 0.041, 27.8e-6      # mass, yaw inertia
CM1, CM2 = 0.287, 0.0545       # drivetrain (pwm control)
DELTAT = 0.01                  # DynamicModel deltat default

INV_MASS = 1.0 / MASS          # constant reciprocals -> plain VPU multiplies
INV_IZ = 1.0 / IZ

_PI = math.pi
_PI_2 = math.pi / 2.0

LANE = 128
HID = 6                        # hidden width of the Fy / Ry MLPs

# Flat parameter layout inside the (40,) SMEM array
FY_W1, FY_B1, FY_W2, FY_B2 = 0, 6, 12, 18
RY_W1, RY_B1, RY_W2, RY_B2 = 19, 25, 31, 37
RX_W, RX_B = 38, 39
NPARAMS = 40


def _round_up(n, m):
    return ((n + m - 1) // m) * m


# --- in-kernel atan2: one divide per call + degree-15 minimax poly -----------
def _atan_poly01(q):
    """arctan(q) for q in [0, 1]  (Abramowitz & Stegun 4.4.49, |err|<=2e-8)."""
    z = q * q
    p = jnp.float32(-0.0040540580)
    p = p * z + 0.0218612288
    p = p * z - 0.0559098861
    p = p * z + 0.0964200441
    p = p * z - 0.1390853351
    p = p * z + 0.1994653599
    p = p * z - 0.3332985605
    p = p * z + 0.9999993329
    return p * q


def _atan2(y, x):
    ax = jnp.abs(x)
    ay = jnp.abs(y)
    mx = jnp.maximum(ax, ay)
    mn = jnp.minimum(ax, ay)
    q = mn / jnp.where(mx == 0.0, 1.0, mx)          # single divide, q in [0,1]
    r = _atan_poly01(q)
    r = jnp.where(ay > ax, _PI_2 - r, r)            # octant unfold
    r = jnp.where(x < 0.0, _PI - r, r)              # quadrant unfold
    return jnp.where(y < 0.0, -r, r)


# --- the Pallas kernel --------------------------------------------------------
def _dyn_kernel(p_ref, x_ref, o_ref):
    # p_ref: (40,) f32 in SMEM.  x_ref: (6, T) f32 VMEM.  o_ref: (3, T) f32 VMEM.
    pwm = x_ref[0:1, :]          # (1, T) lane-dense slices (row 1 = deltatheta,
    theta = x_ref[2:3, :]        #  unused, matches the torch forward)
    vx0 = x_ref[3:4, :]
    vy0 = x_ref[4:5, :]
    w0 = x_ref[5:6, :]

    # Hoisted loop-invariants (computed once, reused by both unrolled steps).
    st = jnp.sin(theta)
    ct = jnp.cos(theta)
    lf_ct = LF * ct
    drive = CM1 - CM2 * vx0      # only depends on vx0?  no -> recompute below
    del drive

    # Hoisted scalar parameter reads from SMEM.
    fy_w1 = [p_ref[FY_W1 + j] for j in range(HID)]
    fy_b1 = [p_ref[FY_B1 + j] for j in range(HID)]
    fy_w2 = [p_ref[FY_W2 + j] for j in range(HID)]
    fy_b2 = p_ref[FY_B2]
    ry_w1 = [p_ref[RY_W1 + j] for j in range(HID)]
    ry_b1 = [p_ref[RY_B1 + j] for j in range(HID)]
    ry_w2 = [p_ref[RY_W2 + j] for j in range(HID)]
    ry_b2 = p_ref[RY_B2]
    rx_w = p_ref[RX_W]
    rx_b = p_ref[RX_B]

    def mlp(a, w1, b1, w2, b2):
        # Linear(1,6) -> ReLU -> Linear(6,1): hidden dim unrolled as 6
        # scalar-broadcast FMAs on the VPU (no XLU reduce, no MXU).
        acc = jnp.zeros_like(a) + b2
        for j in range(HID):
            acc = acc + jnp.maximum(a * w1[j] + b1[j], 0.0) * w2[j]
        return acc

    o0 = jnp.zeros_like(vx0)
    o1 = jnp.zeros_like(vx0)
    o2 = jnp.zeros_like(vx0)
    for _ in range(2):                              # unrolled 2-step integrator
        vx = vx0 + o0
        vy = vy0 + o1
        w = w0 + o2
        alpha_f = theta - _atan2(w * LF + vy, vx)
        alpha_r = _atan2(w * LR - vy, vx)
        Ffy = mlp(alpha_f, fy_w1, fy_b1, fy_w2, fy_b2)
        Fry = mlp(alpha_r, ry_w1, ry_b1, ry_w2, ry_b2)
        Frx = rx_w * (vx * vx) + rx_b               # Rx: Linear(1,1)
        Frx = (CM1 - CM2 * vx) * pwm + Frx
        vx_dot = (Frx - Ffy * st + MASS * vy * w) * INV_MASS
        vy_dot = (Fry + Ffy * ct - MASS * vx * w) * INV_MASS
        w_dot = (Ffy * lf_ct - Fry * LR) * INV_IZ
        o0 = o0 + vx_dot * DELTAT
        o1 = o1 + vy_dot * DELTAT
        o2 = o2 + w_dot * DELTAT

    # Single lane-dense (3, T) store instead of three narrow sublane stores.
    o_ref[...] = jnp.concatenate([o0, o1, o2], axis=0)


# --- cached pallas_call builder (built once per tile configuration) -----------
@functools.lru_cache(maxsize=None)
def _build_pallas_fn(tile_b, num_tiles):
    call = pl.pallas_call(
        _dyn_kernel,
        grid=(num_tiles,),
        out_shape=jax.ShapeDtypeStruct((3, tile_b * num_tiles), jnp.float32),
        in_specs=[
            pl.BlockSpec(memory_space=pltpu.MemorySpace.SMEM),   # (40,) params
            pl.BlockSpec((6, tile_b), lambda i: (0, i)),         # x  (6, B_pad)
        ],
        out_specs=pl.BlockSpec((3, tile_b), lambda i: (0, i)),   # out (3, B_pad)
        compiler_params=pltpu.CompilerParams(
            dimension_semantics=("parallel",)),                  # 2 TCs on v7x
    )
    return jax.jit(call)


def _pack_params(params):
    def vec(name):
        return jnp.asarray(params[name], jnp.float32).reshape(-1)

    def scl(name):
        return jnp.asarray(params[name], jnp.float32).reshape(1)

    flat = jnp.concatenate([
        vec("fy_w1"), vec("fy_b1"), vec("fy_w2"), scl("fy_b2"),
        vec("ry_w1"), vec("ry_b1"), vec("ry_w2"), scl("ry_b2"),
        scl("rx_w"), scl("rx_b"),
    ])
    assert flat.shape == (NPARAMS,)
    return flat


def dynamic_model_forward(x, params, *, tile_b=512):
    """x: (B, 6) [pwm, deltatheta, theta, vx, vy, w] -> (B, 3) [d_vx, d_vy, d_w]."""
    x = jnp.asarray(x, jnp.float32)
    B = x.shape[0]
    tb = min(_round_up(tile_b, LANE), _round_up(B, LANE))
    B_pad = _round_up(B, tb)
    num_tiles = B_pad // tb

    # Layout plumbing: features on sublanes, batch on lanes, zero-padded.
    xt = jnp.zeros((6, B_pad), jnp.float32).at[:, :B].set(x.T)
    p = _pack_params(params)

    out_t = _build_pallas_fn(tb, num_tiles)(p, xt)   # (3, B_pad)
    return out_t[:, :B].T                            # (B, 3)


# --- pure-JAX reference (mirrors the torch forward) ---------------------------
def dynamic_model_ref(x, params):
    x = jnp.asarray(x, jnp.float32)
    pwm = x[:, 0]
    theta = x[:, 2]
    out = jnp.zeros_like(x[:, 3:6])

    def mlp(a, w1, b1, w2, b2):
        h = jnp.maximum(a[:, None] * w1[None, :] + b1[None, :], 0.0)
        return h @ w2 + b2

    w1f = jnp.asarray(params["fy_w1"], jnp.float32)
    b1f = jnp.asarray(params["fy_b1"], jnp.float32)
    w2f = jnp.asarray(params["fy_w2"], jnp.float32)
    b2f = jnp.asarray(params["fy_b2"], jnp.float32)
    w1r = jnp.asarray(params["ry_w1"], jnp.float32)
    b1r = jnp.asarray(params["ry_b1"], jnp.float32)
    w2r = jnp.asarray(params["ry_w2"], jnp.float32)
    b2r = jnp.asarray(params["ry_b2"], jnp.float32)
    rxw = jnp.asarray(params["rx_w"], jnp.float32)
    rxb = jnp.asarray(params["rx_b"], jnp.float32)

    for _ in range(2):
        vx = x[:, 3] + out[:, 0]
        vy = x[:, 4] + out[:, 1]
        w = x[:, 5] + out[:, 2]
        alpha_f = theta - jnp.arctan2(w * LF + vy, vx)
        alpha_r = jnp.arctan2(w * LR - vy, vx)
        Ffy = mlp(alpha_f, w1f, b1f, w2f, b2f)
        Fry = mlp(alpha_r, w1r, b1r, w2r, b2r)
        Frx = rxw * vx ** 2 + rxb
        Frx = (CM1 - CM2 * vx) * pwm + Frx
        vx_dot = (Frx - Ffy * jnp.sin(theta) + MASS * vy * w) / MASS
        vy_dot = (Fry + Ffy * jnp.cos(theta) - MASS * vx * w) / MASS
        w_dot = (Ffy * LF * jnp.cos(theta) - Fry * LR) / IZ
        out = out + jnp.stack([vx_dot, vy_dot, w_dot], axis=1) * DELTAT
    return out


if __name__ == "__main__":
    key = jax.random.PRNGKey(0)
    keys = jax.random.split(key, 16)

    # --- case 1: the module's deterministic __init__ parameters --------------
    B = 8
    x1 = jax.random.uniform(keys[0], (B, 6), minval=-1.0, maxval=1.0,
                            dtype=jnp.float32)
    bias_grid = jnp.asarray(-0.6 + 0.2 * np.arange(6), jnp.float32)
    params_init = {
        "fy_w1": jnp.ones(6, jnp.float32), "fy_b1": bias_grid,
        "fy_w2": jnp.zeros(6, jnp.float32), "fy_b2": 0.0,
        "ry_w1": jnp.ones(6, jnp.float32), "ry_b1": bias_grid,
        "ry_w2": jnp.zeros(6, jnp.float32), "ry_b2": 0.0,
        "rx_w": float(jax.random.uniform(keys[1], (), minval=-1.0, maxval=1.0)),
        "rx_b": float(jax.random.uniform(keys[2], (), minval=-1.0, maxval=1.0)),
    }
    out1 = jax.block_until_ready(dynamic_model_forward(x1, params_init))
    ref1 = dynamic_model_ref(x1, params_init)
    np.testing.assert_allclose(np.asarray(out1), np.asarray(ref1),
                               rtol=3e-4, atol=2e-3)

    # --- case 2: nontrivial weights (exercises MLP + atan2 quadrants) and a
    #             multi-tile grid (tile_b=128, B=160 -> 2 grid steps) ---------
    B2 = 160
    x2 = jax.random.uniform(keys[3], (B2, 6), minval=-2.0, maxval=2.0,
                            dtype=jnp.float32)

    def u(k, shape):
        return jax.random.uniform(k, shape, minval=-1.0, maxval=1.0,
                                  dtype=jnp.float32)

    params_rand = {
        "fy_w1": u(keys[4], (6,)), "fy_b1": u(keys[5], (6,)),
        "fy_w2": u(keys[6], (6,)), "fy_b2": u(keys[7], ()),
        "ry_w1": u(keys[8], (6,)), "ry_b1": u(keys[9], (6,)),
        "ry_w2": u(keys[10], (6,)), "ry_b2": u(keys[11], ()),
        "rx_w": u(keys[12], ()), "rx_b": u(keys[13], ()),
    }
    out2 = jax.block_until_ready(
        dynamic_model_forward(x2, params_rand, tile_b=128))
    ref2 = dynamic_model_ref(x2, params_rand)
    np.testing.assert_allclose(np.asarray(out2), np.asarray(ref2),
                               rtol=3e-4, atol=2e-3)

    print("KERNEL_OK")
</pallas_src>

<mosaic_0001>
module attributes {stable_mosaic.version = 11 : i64} {
  func.func @_dyn_kernel(%arg0: i32, %arg1: memref<40xf32, #tpu.memory_space<smem>>, %arg2: memref<6x128xf32, #tpu.memory_space<vmem>>, %arg3: memref<3x128xf32, #tpu.memory_space<vmem>>) attributes {dimension_semantics = [#tpu.dimension_semantics<parallel>], iteration_bounds = array<i64: 1>, scalar_prefetch = 0 : i64, scratch_operands = 0 : i64, tpu.core_type = #tpu.core_type<tc>, window_params = [{transform_indices = @transform_0, window_bounds = array<i64: 40>}, {transform_indices = @transform_1, window_bounds = array<i64: 6, 128>}, {transform_indices = @transform_2, window_bounds = array<i64: 3, 128>}]} {
    %c0 = arith.constant 0 : index
    %c0_0 = arith.constant 0 : index
    %0 = vector.load %arg2[%c0, %c0_0] : memref<6x128xf32, #tpu.memory_space<vmem>>, vector<1x128xf32>
    %c2 = arith.constant 2 : index
    %c0_1 = arith.constant 0 : index
    %1 = vector.load %arg2[%c2, %c0_1] : memref<6x128xf32, #tpu.memory_space<vmem>>, vector<1x128xf32>
    %c3 = arith.constant 3 : index
    %c0_2 = arith.constant 0 : index
    %2 = vector.load %arg2[%c3, %c0_2] : memref<6x128xf32, #tpu.memory_space<vmem>>, vector<1x128xf32>
    %c4 = arith.constant 4 : index
    %c0_3 = arith.constant 0 : index
    %3 = vector.load %arg2[%c4, %c0_3] : memref<6x128xf32, #tpu.memory_space<vmem>>, vector<1x128xf32>
    %c5 = arith.constant 5 : index
    %c0_4 = arith.constant 0 : index
    %4 = vector.load %arg2[%c5, %c0_4] : memref<6x128xf32, #tpu.memory_space<vmem>>, vector<1x128xf32>
    %5 = math.sin %1 : vector<1x128xf32>
    %6 = math.cos %1 : vector<1x128xf32>
    %cst = arith.constant 2.900000e-02 : f32
    %7 = vector.broadcast %cst : f32 to vector<1x128xf32>
    %8 = arith.mulf %7, %6 : vector<1x128xf32>
    %c0_5 = arith.constant 0 : index
    %9 = memref.load %arg1[%c0_5] : memref<40xf32, #tpu.memory_space<smem>>
    %c1 = arith.constant 1 : index
    %10 = memref.load %arg1[%c1] : memref<40xf32, #tpu.memory_space<smem>>
    %c2_6 = arith.constant 2 : index
    %11 = memref.load %arg1[%c2_6] : memref<40xf32, #tpu.memory_space<smem>>
    %c3_7 = arith.constant 3 : index
    %12 = memref.load %arg1[%c3_7] : memref<40xf32, #tpu.memory_space<smem>>
    %c4_8 = arith.constant 4 : index
    %13 = memref.load %arg1[%c4_8] : memref<40xf32, #tpu.memory_space<smem>>
    %c5_9 = arith.constant 5 : index
    %14 = memref.load %arg1[%c5_9] : memref<40xf32, #tpu.memory_space<smem>>
    %c6 = arith.constant 6 : index
    %15 = memref.load %arg1[%c6] : memref<40xf32, #tpu.memory_space<smem>>
    %c7 = arith.constant 7 : index
    %16 = memref.load %arg1[%c7] : memref<40xf32, #tpu.memory_space<smem>>
    %c8 = arith.constant 8 : index
    %17 = memref.load %arg1[%c8] : memref<40xf32, #tpu.memory_space<smem>>
    %c9 = arith.constant 9 : index
    %18 = memref.load %arg1[%c9] : memref<40xf32, #tpu.memory_space<smem>>
    %c10 = arith.constant 10 : index
    %19 = memref.load %arg1[%c10] : memref<40xf32, #tpu.memory_space<smem>>
    %c11 = arith.constant 11 : index
    %20 = memref.load %arg1[%c11] : memref<40xf32, #tpu.memory_space<smem>>
    %c12 = arith.constant 12 : index
    %21 = memref.load %arg1[%c12] : memref<40xf32, #tpu.memory_space<smem>>
    %c13 = arith.constant 13 : index
    %22 = memref.load %arg1[%c13] : memref<40xf32, #tpu.memory_space<smem>>
    %c14 = arith.constant 14 : index
    %23 = memref.load %arg1[%c14] : memref<40xf32, #tpu.memory_space<smem>>
    %c15 = arith.constant 15 : index
    %24 = memref.load %arg1[%c15] : memref<40xf32, #tpu.memory_space<smem>>
    %c16 = arith.constant 16 : index
    %25 = memref.load %arg1[%c16] : memref<40xf32, #tpu.memory_space<smem>>
    %c17 = arith.constant 17 : index
    %26 = memref.load %arg1[%c17] : memref<40xf32, #tpu.memory_space<smem>>
    %c18 = arith.constant 18 : index
    %27 = memref.load %arg1[%c18] : memref<40xf32, #tpu.memory_space<smem>>
    %c19 = arith.constant 19 : index
    %28 = memref.load %arg1[%c19] : memref<40xf32, #tpu.memory_space<smem>>
    %c20 = arith.constant 20 : index
    %29 = memref.load %arg1[%c20] : memref<40xf32, #tpu.memory_space<smem>>
    %c21 = arith.constant 21 : index
    %30 = memref.load %arg1[%c21] : memref<40xf32, #tpu.memory_space<smem>>
    %c22 = arith.constant 22 : index
    %31 = memref.load %arg1[%c22] : memref<40xf32, #tpu.memory_space<smem>>
    %c23 = arith.constant 23 : index
    %32 = memref.load %arg1[%c23] : memref<40xf32, #tpu.memory_space<smem>>
    %c24 = arith.constant 24 : index
    %33 = memref.load %arg1[%c24] : memref<40xf32, #tpu.memory_space<smem>>
    %c25 = arith.constant 25 : index
    %34 = memref.load %arg1[%c25] : memref<40xf32, #tpu.memory_space<smem>>
    %c26 = arith.constant 26 : index
    %35 = memref.load %arg1[%c26] : memref<40xf32, #tpu.memory_space<smem>>
    %c27 = arith.constant 27 : index
    %36 = memref.load %arg1[%c27] : memref<40xf32, #tpu.memory_space<smem>>
    %c28 = arith.constant 28 : index
    %37 = memref.load %arg1[%c28] : memref<40xf32, #tpu.memory_space<smem>>
    %c29 = arith.constant 29 : index
    %38 = memref.load %arg1[%c29] : memref<40xf32, #tpu.memory_space<smem>>
    %c30 = arith.constant 30 : index
    %39 = memref.load %arg1[%c30] : memref<40xf32, #tpu.memory_space<smem>>
    %c31 = arith.constant 31 : index
    %40 = memref.load %arg1[%c31] : memref<40xf32, #tpu.memory_space<smem>>
    %c32 = arith.constant 32 : index
    %41 = memref.load %arg1[%c32] : memref<40xf32, #tpu.memory_space<smem>>
    %c33 = arith.constant 33 : index
    %42 = memref.load %arg1[%c33] : memref<40xf32, #tpu.memory_space<smem>>
    %c34 = arith.constant 34 : index
    %43 = memref.load %arg1[%c34] : memref<40xf32, #tpu.memory_space<smem>>
    %c35 = arith.constant 35 : index
    %44 = memref.load %arg1[%c35] : memref<40xf32, #tpu.memory_space<smem>>
    %c36 = arith.constant 36 : index
    %45 = memref.load %arg1[%c36] : memref<40xf32, #tpu.memory_space<smem>>
    %c37 = arith.constant 37 : index
    %46 = memref.load %arg1[%c37] : memref<40xf32, #tpu.memory_space<smem>>
    %c38 = arith.constant 38 : index
    %47 = memref.load %arg1[%c38] : memref<40xf32, #tpu.memory_space<smem>>
    %c39 = arith.constant 39 : index
    %48 = memref.load %arg1[%c39] : memref<40xf32, #tpu.memory_space<smem>>
    %cst_10 = arith.constant 0.000000e+00 : f32
    %49 = vector.broadcast %cst_10 : f32 to vector<1x128xf32>
    %cst_11 = arith.constant 0.000000e+00 : f32
    %50 = vector.broadcast %cst_11 : f32 to vector<1x128xf32>
    %cst_12 = arith.constant 0.000000e+00 : f32
    %51 = vector.broadcast %cst_12 : f32 to vector<1x128xf32>
    %52 = arith.addf %2, %49 : vector<1x128xf32>
    %53 = arith.addf %3, %50 : vector<1x128xf32>
    %54 = arith.addf %4, %51 : vector<1x128xf32>
    %cst_13 = arith.constant 2.900000e-02 : f32
    %55 = vector.broadcast %cst_13 : f32 to vector<1x128xf32>
    %56 = arith.mulf %54, %55 : vector<1x128xf32>
    %57 = arith.addf %56, %53 : vector<1x128xf32>
    %58 = math.absf %52 : vector<1x128xf32>
    %59 = math.absf %57 : vector<1x128xf32>
    %60 = arith.maximumf %58, %59 : vector<1x128xf32>
    %61 = arith.minimumf %58, %59 : vector<1x128xf32>
    %cst_14 = arith.constant 0.000000e+00 : f32
    %62 = vector.broadcast %cst_14 : f32 to vector<1x128xf32>
    %63 = arith.cmpf oeq, %60, %62 : vector<1x128xf32>
    %cst_15 = arith.constant 1.000000e+00 : f32
    %64 = vector.broadcast %cst_15 : f32 to vector<1x128xf32>
    %65 = arith.select %63, %64, %60 : vector<1x128xi1>, vector<1x128xf32>
    %66 = arith.divf %61, %65 : vector<1x128xf32>
    %67 = arith.mulf %66, %66 : vector<1x128xf32>
    %cst_16 = arith.constant -0.00405405788 : f32
    %68 = vector.broadcast %cst_16 : f32 to vector<1x128xf32>
    %69 = arith.mulf %68, %67 : vector<1x128xf32>
    %cst_17 = arith.constant 0.0218612291 : f32
    %70 = vector.broadcast %cst_17 : f32 to vector<1x128xf32>
    %71 = arith.addf %69, %70 : vector<1x128xf32>
    %72 = arith.mulf %71, %67 : vector<1x128xf32>
    %cst_18 = arith.constant 0.055909887 : f32
    %73 = vector.broadcast %cst_18 : f32 to vector<1x128xf32>
    %74 = arith.subf %72, %73 : vector<1x128xf32>
    %75 = arith.mulf %74, %67 : vector<1x128xf32>
    %cst_19 = arith.constant 0.0964200422 : f32
    %76 = vector.broadcast %cst_19 : f32 to vector<1x128xf32>
    %77 = arith.addf %75, %76 : vector<1x128xf32>
    %78 = arith.mulf %77, %67 : vector<1x128xf32>
    %cst_20 = arith.constant 0.139085338 : f32
    %79 = vector.broadcast %cst_20 : f32 to vector<1x128xf32>
    %80 = arith.subf %78, %79 : vector<1x128xf32>
    %81 = arith.mulf %80, %67 : vector<1x128xf32>
    %cst_21 = arith.constant 0.199465364 : f32
    %82 = vector.broadcast %cst_21 : f32 to vector<1x128xf32>
    %83 = arith.addf %81, %82 : vector<1x128xf32>
    %84 = arith.mulf %83, %67 : vector<1x128xf32>
    %cst_22 = arith.constant 0.333298564 : f32
    %85 = vector.broadcast %cst_22 : f32 to vector<1x128xf32>
    %86 = arith.subf %84, %85 : vector<1x128xf32>
    %87 = arith.mulf %86, %67 : vector<1x128xf32>
    %cst_23 = arith.constant 0.999999344 : f32
    %88 = vector.broadcast %cst_23 : f32 to vector<1x128xf32>
    %89 = arith.addf %87, %88 : vector<1x128xf32>
    %90 = arith.mulf %89, %66 : vector<1x128xf32>
    %91 = arith.cmpf ogt, %59, %58 : vector<1x128xf32>
    %cst_24 = arith.constant 1.57079637 : f32
    %92 = vector.broadcast %cst_24 : f32 to vector<1x128xf32>
    %93 = arith.subf %92, %90 : vector<1x128xf32>
    %94 = arith.select %91, %93, %90 : vector<1x128xi1>, vector<1x128xf32>
    %cst_25 = arith.constant 0.000000e+00 : f32
    %95 = vector.broadcast %cst_25 : f32 to vector<1x128xf32>
    %96 = arith.cmpf olt, %52, %95 : vector<1x128xf32>
    %cst_26 = arith.constant 3.14159274 : f32
    %97 = vector.broadcast %cst_26 : f32 to vector<1x128xf32>
    %98 = arith.subf %97, %94 : vector<1x128xf32>
    %99 = arith.select %96, %98, %94 : vector<1x128xi1>, vector<1x128xf32>
    %cst_27 = arith.constant 0.000000e+00 : f32
    %100 = vector.broadcast %cst_27 : f32 to vector<1x128xf32>
    %101 = arith.cmpf olt, %57, %100 : vector<1x128xf32>
    %cst_28 = arith.constant 0.000000e+00 : f32
    %102 = vector.broadcast %cst_28 : f32 to vector<1x128xf32>
    %103 = arith.subf %102, %99 : vector<1x128xf32>
    %104 = arith.select %101, %103, %99 : vector<1x128xi1>, vector<1x128xf32>
    %105 = arith.subf %1, %104 : vector<1x128xf32>
    %cst_29 = arith.constant 3.300000e-02 : f32
    %106 = vector.broadcast %cst_29 : f32 to vector<1x128xf32>
    %107 = arith.mulf %54, %106 : vector<1x128xf32>
    %108 = arith.subf %107, %53 : vector<1x128xf32>
    %109 = math.absf %52 : vector<1x128xf32>
    %110 = math.absf %108 : vector<1x128xf32>
    %111 = arith.maximumf %109, %110 : vector<1x128xf32>
    %112 = arith.minimumf %109, %110 : vector<1x128xf32>
    %cst_30 = arith.constant 0.000000e+00 : f32
    %113 = vector.broadcast %cst_30 : f32 to vector<1x128xf32>
    %114 = arith.cmpf oeq, %111, %113 : vector<1x128xf32>
    %cst_31 = arith.constant 1.000000e+00 : f32
    %115 = vector.broadcast %cst_31 : f32 to vector<1x128xf32>
    %116 = arith.select %114, %115, %111 : vector<1x128xi1>, vector<1x128xf32>
    %117 = arith.divf %112, %116 : vector<1x128xf32>
    %118 = arith.mulf %117, %117 : vector<1x128xf32>
    %cst_32 = arith.constant -0.00405405788 : f32
    %119 = vector.broadcast %cst_32 : f32 to vector<1x128xf32>
    %120 = arith.mulf %119, %118 : vector<1x128xf32>
    %cst_33 = arith.constant 0.0218612291 : f32
    %121 = vector.broadcast %cst_33 : f32 to vector<1x128xf32>
    %122 = arith.addf %120, %121 : vector<1x128xf32>
    %123 = arith.mulf %122, %118 : vector<1x128xf32>
    %cst_34 = arith.constant 0.055909887 : f32
    %124 = vector.broadcast %cst_34 : f32 to vector<1x128xf32>
    %125 = arith.subf %123, %124 : vector<1x128xf32>
    %126 = arith.mulf %125, %118 : vector<1x128xf32>
    %cst_35 = arith.constant 0.0964200422 : f32
    %127 = vector.broadcast %cst_35 : f32 to vector<1x128xf32>
    %128 = arith.addf %126, %127 : vector<1x128xf32>
    %129 = arith.mulf %128, %118 : vector<1x128xf32>
    %cst_36 = arith.constant 0.139085338 : f32
    %130 = vector.broadcast %cst_36 : f32 to vector<1x128xf32>
    %131 = arith.subf %129, %130 : vector<1x128xf32>
    %132 = arith.mulf %131, %118 : vector<1x128xf32>
    %cst_37 = arith.constant 0.199465364 : f32
    %133 = vector.broadcast %cst_37 : f32 to vector<1x128xf32>
    %134 = arith.addf %132, %133 : vector<1x128xf32>
    %135 = arith.mulf %134, %118 : vector<1x128xf32>
    %cst_38 = arith.constant 0.333298564 : f32
    %136 = vector.broadcast %cst_38 : f32 to vector<1x128xf32>
    %137 = arith.subf %135, %136 : vector<1x128xf32>
    %138 = arith.mulf %137, %118 : vector<1x128xf32>
    %cst_39 = arith.constant 0.999999344 : f32
    %139 = vector.broadcast %cst_39 : f32 to vector<1x128xf32>
    %140 = arith.addf %138, %139 : vector<1x128xf32>
    %141 = arith.mulf %140, %117 : vector<1x128xf32>
    %142 = arith.cmpf ogt, %110, %109 : vector<1x128xf32>
    %cst_40 = arith.constant 1.57079637 : f32
    %143 = vector.broadcast %cst_40 : f32 to vector<1x128xf32>
    %144 = arith.subf %143, %141 : vector<1x128xf32>
    %145 = arith.select %142, %144, %141 : vector<1x128xi1>, vector<1x128xf32>
    %cst_41 = arith.constant 0.000000e+00 : f32
    %146 = vector.broadcast %cst_41 : f32 to vector<1x128xf32>
    %147 = arith.cmpf olt, %52, %146 : vector<1x128xf32>
    %cst_42 = arith.constant 3.14159274 : f32
    %148 = vector.broadcast %cst_42 : f32 to vector<1x128xf32>
    %149 = arith.subf %148, %145 : vector<1x128xf32>
    %150 = arith.select %147, %149, %145 : vector<1x128xi1>, vector<1x128xf32>
    %cst_43 = arith.constant 0.000000e+00 : f32
    %151 = vector.broadcast %cst_43 : f32 to vector<1x128xf32>
    %152 = arith.cmpf olt, %108, %151 : vector<1x128xf32>
    %cst_44 = arith.constant 0.000000e+00 : f32
    %153 = vector.broadcast %cst_44 : f32 to vector<1x128xf32>
    %154 = arith.subf %153, %150 : vector<1x128xf32>
    %155 = arith.select %152, %154, %150 : vector<1x128xi1>, vector<1x128xf32>
    %cst_45 = arith.constant 0.000000e+00 : f32
    %156 = vector.broadcast %cst_45 : f32 to vector<1x128xf32>
    %157 = vector.broadcast %27 : f32 to vector<1x128xf32>
    %158 = arith.addf %156, %157 : vector<1x128xf32>
    %159 = vector.broadcast %9 : f32 to vector<1x128xf32>
    %160 = arith.mulf %105, %159 : vector<1x128xf32>
    %161 = vector.broadcast %15 : f32 to vector<1x128xf32>
    %162 = arith.addf %160, %161 : vector<1x128xf32>
    %cst_46 = arith.constant 0.000000e+00 : f32
    %163 = vector.broadcast %cst_46 : f32 to vector<1x128xf32>
    %164 = arith.maximumf %162, %163 : vector<1x128xf32>
    %165 = vector.broadcast %21 : f32 to vector<1x128xf32>
    %166 = arith.mulf %164, %165 : vector<1x128xf32>
    %167 = arith.addf %158, %166 : vector<1x128xf32>
    %168 = vector.broadcast %10 : f32 to vector<1x128xf32>
    %169 = arith.mulf %105, %168 : vector<1x128xf32>
    %170 = vector.broadcast %16 : f32 to vector<1x128xf32>
    %171 = arith.addf %169, %170 : vector<1x128xf32>
    %cst_47 = arith.constant 0.000000e+00 : f32
    %172 = vector.broadcast %cst_47 : f32 to vector<1x128xf32>
    %173 = arith.maximumf %171, %172 : vector<1x128xf32>
    %174 = vector.broadcast %22 : f32 to vector<1x128xf32>
    %175 = arith.mulf %173, %174 : vector<1x128xf32>
    %176 = arith.addf %167, %175 : vector<1x128xf32>
    %177 = vector.broadcast %11 : f32 to vector<1x128xf32>
    %178 = arith.mulf %105, %177 : vector<1x128xf32>
    %179 = vector.broadcast %17 : f32 to vector<1x128xf32>
    %180 = arith.addf %178, %179 : vector<1x128xf32>
    %cst_48 = arith.constant 0.000000e+00 : f32
    %181 = vector.broadcast %cst_48 : f32 to vector<1x128xf32>
    %182 = arith.maximumf %180, %181 : vector<1x128xf32>
    %183 = vector.broadcast %23 : f32 to vector<1x128xf32>
    %184 = arith.mulf %182, %183 : vector<1x128xf32>
    %185 = arith.addf %176, %184 : vector<1x128xf32>
    %186 = vector.broadcast %12 : f32 to vector<1x128xf32>
    %187 = arith.mulf %105, %186 : vector<1x128xf32>
    %188 = vector.broadcast %18 : f32 to vector<1x128xf32>
    %189 = arith.addf %187, %188 : vector<1x128xf32>
    %cst_49 = arith.constant 0.000000e+00 : f32
    %190 = vector.broadcast %cst_49 : f32 to vector<1x128xf32>
    %191 = arith.maximumf %189, %190 : vector<1x128xf32>
    %192 = vector.broadcast %24 : f32 to vector<1x128xf32>
    %193 = arith.mulf %191, %192 : vector<1x128xf32>
    %194 = arith.addf %185, %193 : vector<1x128xf32>
    %195 = vector.broadcast %13 : f32 to vector<1x128xf32>
    %196 = arith.mulf %105, %195 : vector<1x128xf32>
    %197 = vector.broadcast %19 : f32 to vector<1x128xf32>
    %198 = arith.addf %196, %197 : vector<1x128xf32>
    %cst_50 = arith.constant 0.000000e+00 : f32
    %199 = vector.broadcast %cst_50 : f32 to vector<1x128xf32>
    %200 = arith.maximumf %198, %199 : vector<1x128xf32>
    %201 = vector.broadcast %25 : f32 to vector<1x128xf32>
    %202 = arith.mulf %200, %201 : vector<1x128xf32>
    %203 = arith.addf %194, %202 : vector<1x128xf32>
    %204 = vector.broadcast %14 : f32 to vector<1x128xf32>
    %205 = arith.mulf %105, %204 : vector<1x128xf32>
    %206 = vector.broadcast %20 : f32 to vector<1x128xf32>
    %207 = arith.addf %205, %206 : vector<1x128xf32>
    %cst_51 = arith.constant 0.000000e+00 : f32
    %208 = vector.broadcast %cst_51 : f32 to vector<1x128xf32>
    %209 = arith.maximumf %207, %208 : vector<1x128xf32>
    %210 = vector.broadcast %26 : f32 to vector<1x128xf32>
    %211 = arith.mulf %209, %210 : vector<1x128xf32>
    %212 = arith.addf %203, %211 : vector<1x128xf32>
    %cst_52 = arith.constant 0.000000e+00 : f32
    %213 = vector.broadcast %cst_52 : f32 to vector<1x128xf32>
    %214 = vector.broadcast %46 : f32 to vector<1x128xf32>
    %215 = arith.addf %213, %214 : vector<1x128xf32>
    %216 = vector.broadcast %28 : f32 to vector<1x128xf32>
    %217 = arith.mulf %155, %216 : vector<1x128xf32>
    %218 = vector.broadcast %34 : f32 to vector<1x128xf32>
    %219 = arith.addf %217, %218 : vector<1x128xf32>
    %cst_53 = arith.constant 0.000000e+00 : f32
    %220 = vector.broadcast %cst_53 : f32 to vector<1x128xf32>
    %221 = arith.maximumf %219, %220 : vector<1x128xf32>
    %222 = vector.broadcast %40 : f32 to vector<1x128xf32>
    %223 = arith.mulf %221, %222 : vector<1x128xf32>
    %224 = arith.addf %215, %223 : vector<1x128xf32>
    %225 = vector.broadcast %29 : f32 to vector<1x128xf32>
    %226 = arith.mulf %155, %225 : vector<1x128xf32>
    %227 = vector.broadcast %35 : f32 to vector<1x128xf32>
    %228 = arith.addf %226, %227 : vector<1x128xf32>
    %cst_54 = arith.constant 0.000000e+00 : f32
    %229 = vector.broadcast %cst_54 : f32 to vector<1x128xf32>
    %230 = arith.maximumf %228, %229 : vector<1x128xf32>
    %231 = vector.broadcast %41 : f32 to vector<1x128xf32>
    %232 = arith.mulf %230, %231 : vector<1x128xf32>
    %233 = arith.addf %224, %232 : vector<1x128xf32>
    %234 = vector.broadcast %30 : f32 to vector<1x128xf32>
    %235 = arith.mulf %155, %234 : vector<1x128xf32>
    %236 = vector.broadcast %36 : f32 to vector<1x128xf32>
    %237 = arith.addf %235, %236 : vector<1x128xf32>
    %cst_55 = arith.constant 0.000000e+00 : f32
    %238 = vector.broadcast %cst_55 : f32 to vector<1x128xf32>
    %239 = arith.maximumf %237, %238 : vector<1x128xf32>
    %240 = vector.broadcast %42 : f32 to vector<1x128xf32>
    %241 = arith.mulf %239, %240 : vector<1x128xf32>
    %242 = arith.addf %233, %241 : vector<1x128xf32>
    %243 = vector.broadcast %31 : f32 to vector<1x128xf32>
    %244 = arith.mulf %155, %243 : vector<1x128xf32>
    %245 = vector.broadcast %37 : f32 to vector<1x128xf32>
    %246 = arith.addf %244, %245 : vector<1x128xf32>
    %cst_56 = arith.constant 0.000000e+00 : f32
    %247 = vector.broadcast %cst_56 : f32 to vector<1x128xf32>
    %248 = arith.maximumf %246, %247 : vector<1x128xf32>
    %249 = vector.broadcast %43 : f32 to vector<1x128xf32>
    %250 = arith.mulf %248, %249 : vector<1x128xf32>
    %251 = arith.addf %242, %250 : vector<1x128xf32>
    %252 = vector.broadcast %32 : f32 to vector<1x128xf32>
    %253 = arith.mulf %155, %252 : vector<1x128xf32>
    %254 = vector.broadcast %38 : f32 to vector<1x128xf32>
    %255 = arith.addf %253, %254 : vector<1x128xf32>
    %cst_57 = arith.constant 0.000000e+00 : f32
    %256 = vector.broadcast %cst_57 : f32 to vector<1x128xf32>
    %257 = arith.maximumf %255, %256 : vector<1x128xf32>
    %258 = vector.broadcast %44 : f32 to vector<1x128xf32>
    %259 = arith.mulf %257, %258 : vector<1x128xf32>
    %260 = arith.addf %251, %259 : vector<1x128xf32>
    %261 = vector.broadcast %33 : f32 to vector<1x128xf32>
    %262 = arith.mulf %155, %261 : vector<1x128xf32>
    %263 = vector.broadcast %39 : f32 to vector<1x128xf32>
    %264 = arith.addf %262, %263 : vector<1x128xf32>
    %cst_58 = arith.constant 0.000000e+00 : f32
    %265 = vector.broadcast %cst_58 : f32 to vector<1x128xf32>
    %266 = arith.maximumf %264, %265 : vector<1x128xf32>
    %267 = vector.broadcast %45 : f32 to vector<1x128xf32>
    %268 = arith.mulf %266, %267 : vector<1x128xf32>
    %269 = arith.addf %260, %268 : vector<1x128xf32>
    %270 = arith.mulf %52, %52 : vector<1x128xf32>
    %271 = vector.broadcast %47 : f32 to vector<1x128xf32>
    %272 = arith.mulf %271, %270 : vector<1x128xf32>
    %273 = vector.broadcast %48 : f32 to vector<1x128xf32>
    %274 = arith.addf %272, %273 : vector<1x128xf32>
    %cst_59 = arith.constant 5.450000e-02 : f32
    %275 = vector.broadcast %cst_59 : f32 to vector<1x128xf32>
    %276 = arith.mulf %275, %52 : vector<1x128xf32>
    %cst_60 = arith.constant 2.870000e-01 : f32
    %277 = vector.broadcast %cst_60 : f32 to vector<1x128xf32>
    %278 = arith.subf %277, %276 : vector<1x128xf32>
    %279 = arith.mulf %278, %0 : vector<1x128xf32>
    %280 = arith.addf %279, %274 : vector<1x128xf32>
    %281 = arith.mulf %212, %5 : vector<1x128xf32>
    %282 = arith.subf %280, %281 : vector<1x128xf32>
    %cst_61 = arith.constant 4.100000e-02 : f32
    %283 = vector.broadcast %cst_61 : f32 to vector<1x128xf32>
    %284 = arith.mulf %283, %53 : vector<1x128xf32>
    %285 = arith.mulf %284, %54 : vector<1x128xf32>
    %286 = arith.addf %282, %285 : vector<1x128xf32>
    %cst_62 = arith.constant 24.3902435 : f32
    %287 = vector.broadcast %cst_62 : f32 to vector<1x128xf32>
    %288 = arith.mulf %286, %287 : vector<1x128xf32>
    %289 = arith.mulf %212, %6 : vector<1x128xf32>
    %290 = arith.addf %269, %289 : vector<1x128xf32>
    %cst_63 = arith.constant 4.100000e-02 : f32
    %291 = vector.broadcast %cst_63 : f32 to vector<1x128xf32>
    %292 = arith.mulf %291, %52 : vector<1x128xf32>
    %293 = arith.mulf %292, %54 : vector<1x128xf32>
    %294 = arith.subf %290, %293 : vector<1x128xf32>
    %cst_64 = arith.constant 24.3902435 : f32
    %295 = vector.broadcast %cst_64 : f32 to vector<1x128xf32>
    %296 = arith.mulf %294, %295 : vector<1x128xf32>
    %297 = arith.mulf %212, %8 : vector<1x128xf32>
    %cst_65 = arith.constant 3.300000e-02 : f32
    %298 = vector.broadcast %cst_65 : f32 to vector<1x128xf32>
    %299 = arith.mulf %269, %298 : vector<1x128xf32>
    %300 = arith.subf %297, %299 : vector<1x128xf32>
    %cst_66 = arith.constant 35971.2227 : f32
    %301 = vector.broadcast %cst_66 : f32 to vector<1x128xf32>
    %302 = arith.mulf %300, %301 : vector<1x128xf32>
    %cst_67 = arith.constant 0.00999999977 : f32
    %303 = vector.broadcast %cst_67 : f32 to vector<1x128xf32>
    %304 = arith.mulf %288, %303 : vector<1x128xf32>
    %305 = arith.addf %49, %304 : vector<1x128xf32>
    %cst_68 = arith.constant 0.00999999977 : f32
    %306 = vector.broadcast %cst_68 : f32 to vector<1x128xf32>
    %307 = arith.mulf %296, %306 : vector<1x128xf32>
    %308 = arith.addf %50, %307 : vector<1x128xf32>
    %cst_69 = arith.constant 0.00999999977 : f32
    %309 = vector.broadcast %cst_69 : f32 to vector<1x128xf32>
    %310 = arith.mulf %302, %309 : vector<1x128xf32>
    %311 = arith.addf %51, %310 : vector<1x128xf32>
    %312 = arith.addf %2, %305 : vector<1x128xf32>
    %313 = arith.addf %3, %308 : vector<1x128xf32>
    %314 = arith.addf %4, %311 : vector<1x128xf32>
    %cst_70 = arith.constant 2.900000e-02 : f32
    %315 = vector.broadcast %cst_70 : f32 to vector<1x128xf32>
    %316 = arith.mulf %314, %315 : vector<1x128xf32>
    %317 = arith.addf %316, %313 : vector<1x128xf32>
    %318 = math.absf %312 : vector<1x128xf32>
    %319 = math.absf %317 : vector<1x128xf32>
    %320 = arith.maximumf %318, %319 : vector<1x128xf32>
    %321 = arith.minimumf %318, %319 : vector<1x128xf32>
    %cst_71 = arith.constant 0.000000e+00 : f32
    %322 = vector.broadcast %cst_71 : f32 to vector<1x128xf32>
    %323 = arith.cmpf oeq, %320, %322 : vector<1x128xf32>
    %cst_72 = arith.constant 1.000000e+00 : f32
    %324 = vector.broadcast %cst_72 : f32 to vector<1x128xf32>
    %325 = arith.select %323, %324, %320 : vector<1x128xi1>, vector<1x128xf32>
    %326 = arith.divf %321, %325 : vector<1x128xf32>
    %327 = arith.mulf %326, %326 : vector<1x128xf32>
    %cst_73 = arith.constant -0.00405405788 : f32
    %328 = vector.broadcast %cst_73 : f32 to vector<1x128xf32>
    %329 = arith.mulf %328, %327 : vector<1x128xf32>
    %cst_74 = arith.constant 0.0218612291 : f32
    %330 = vector.broadcast %cst_74 : f32 to vector<1x128xf32>
    %331 = arith.addf %329, %330 : vector<1x128xf32>
    %332 = arith.mulf %331, %327 : vector<1x128xf32>
    %cst_75 = arith.constant 0.055909887 : f32
    %333 = vector.broadcast %cst_75 : f32 to vector<1x128xf32>
    %334 = arith.subf %332, %333 : vector<1x128xf32>
    %335 = arith.mulf %334, %327 : vector<1x128xf32>
    %cst_76 = arith.constant 0.0964200422 : f32
    %336 = vector.broadcast %cst_76 : f32 to vector<1x128xf32>
    %337 = arith.addf %335, %336 : vector<1x128xf32>
    %338 = arith.mulf %337, %327 : vector<1x128xf32>
    %cst_77 = arith.constant 0.139085338 : f32
    %339 = vector.broadcast %cst_77 : f32 to vector<1x128xf32>
    %340 = arith.subf %338, %339 : vector<1x128xf32>
    %341 = arith.mulf %340, %327 : vector<1x128xf32>
    %cst_78 = arith.constant 0.199465364 : f32
    %342 = vector.broadcast %cst_78 : f32 to vector<1x128xf32>
    %343 = arith.addf %341, %342 : vector<1x128xf32>
    %344 = arith.mulf %343, %327 : vector<1x128xf32>
    %cst_79 = arith.constant 0.333298564 : f32
    %345 = vector.broadcast %cst_79 : f32 to vector<1x128xf32>
    %346 = arith.subf %344, %345 : vector<1x128xf32>
    %347 = arith.mulf %346, %327 : vector<1x128xf32>
    %cst_80 = arith.constant 0.999999344 : f32
    %348 = vector.broadcast %cst_80 : f32 to vector<1x128xf32>
    %349 = arith.addf %347, %348 : vector<1x128xf32>
    %350 = arith.mulf %349, %326 : vector<1x128xf32>
    %351 = arith.cmpf ogt, %319, %318 : vector<1x128xf32>
    %cst_81 = arith.constant 1.57079637 : f32
    %352 = vector.broadcast %cst_81 : f32 to vector<1x128xf32>
    %353 = arith.subf %352, %350 : vector<1x128xf32>
    %354 = arith.select %351, %353, %350 : vector<1x128xi1>, vector<1x128xf32>
    %cst_82 = arith.constant 0.000000e+00 : f32
    %355 = vector.broadcast %cst_82 : f32 to vector<1x128xf32>
    %356 = arith.cmpf olt, %312, %355 : vector<1x128xf32>
    %cst_83 = arith.constant 3.14159274 : f32
    %357 = vector.broadcast %cst_83 : f32 to vector<1x128xf32>
    %358 = arith.subf %357, %354 : vector<1x128xf32>
    %359 = arith.select %356, %358, %354 : vector<1x128xi1>, vector<1x128xf32>
    %cst_84 = arith.constant 0.000000e+00 : f32
    %360 = vector.broadcast %cst_84 : f32 to vector<1x128xf32>
    %361 = arith.cmpf olt, %317, %360 : vector<1x128xf32>
    %cst_85 = arith.constant 0.000000e+00 : f32
    %362 = vector.broadcast %cst_85 : f32 to vector<1x128xf32>
    %363 = arith.subf %362, %359 : vector<1x128xf32>
    %364 = arith.select %361, %363, %359 : vector<1x128xi1>, vector<1x128xf32>
    %365 = arith.subf %1, %364 : vector<1x128xf32>
    %cst_86 = arith.constant 3.300000e-02 : f32
    %366 = vector.broadcast %cst_86 : f32 to vector<1x128xf32>
    %367 = arith.mulf %314, %366 : vector<1x128xf32>
    %368 = arith.subf %367, %313 : vector<1x128xf32>
    %369 = math.absf %312 : vector<1x128xf32>
    %370 = math.absf %368 : vector<1x128xf32>
    %371 = arith.maximumf %369, %370 : vector<1x128xf32>
    %372 = arith.minimumf %369, %370 : vector<1x128xf32>
    %cst_87 = arith.constant 0.000000e+00 : f32
    %373 = vector.broadcast %cst_87 : f32 to vector<1x128xf32>
    %374 = arith.cmpf oeq, %371, %373 : vector<1x128xf32>
    %cst_88 = arith.constant 1.000000e+00 : f32
    %375 = vector.broadcast %cst_88 : f32 to vector<1x128xf32>
    %376 = arith.select %374, %375, %371 : vector<1x128xi1>, vector<1x128xf32>
    %377 = arith.divf %372, %376 : vector<1x128xf32>
    %378 = arith.mulf %377, %377 : vector<1x128xf32>
    %cst_89 = arith.constant -0.00405405788 : f32
    %379 = vector.broadcast %cst_89 : f32 to vector<1x128xf32>
    %380 = arith.mulf %379, %378 : vector<1x128xf32>
    %cst_90 = arith.constant 0.0218612291 : f32
    %381 = vector.broadcast %cst_90 : f32 to vector<1x128xf32>
    %382 = arith.addf %380, %381 : vector<1x128xf32>
    %383 = arith.mulf %382, %378 : vector<1x128xf32>
    %cst_91 = arith.constant 0.055909887 : f32
    %384 = vector.broadcast %cst_91 : f32 to vector<1x128xf32>
    %385 = arith.subf %383, %384 : vector<1x128xf32>
    %386 = arith.mulf %385, %378 : vector<1x128xf32>
    %cst_92 = arith.constant 0.0964200422 : f32
    %387 = vector.broadcast %cst_92 : f32 to vector<1x128xf32>
    %388 = arith.addf %386, %387 : vector<1x128xf32>
    %389 = arith.mulf %388, %378 : vector<1x128xf32>
    %cst_93 = arith.constant 0.139085338 : f32
    %390 = vector.broadcast %cst_93 : f32 to vector<1x128xf32>
    %391 = arith.subf %389, %390 : vector<1x128xf32>
    %392 = arith.mulf %391, %378 : vector<1x128xf32>
    %cst_94 = arith.constant 0.199465364 : f32
    %393 = vector.broadcast %cst_94 : f32 to vector<1x128xf32>
    %394 = arith.addf %392, %393 : vector<1x128xf32>
    %395 = arith.mulf %394, %378 : vector<1x128xf32>
    %cst_95 = arith.constant 0.333298564 : f32
    %396 = vector.broadcast %cst_95 : f32 to vector<1x128xf32>
    %397 = arith.subf %395, %396 : vector<1x128xf32>
    %398 = arith.mulf %397, %378 : vector<1x128xf32>
    %cst_96 = arith.constant 0.999999344 : f32
    %399 = vector.broadcast %cst_96 : f32 to vector<1x128xf32>
    %400 = arith.addf %398, %399 : vector<1x128xf32>
    %401 = arith.mulf %400, %377 : vector<1x128xf32>
    %402 = arith.cmpf ogt, %370, %369 : vector<1x128xf32>
    %cst_97 = arith.constant 1.57079637 : f32
    %403 = vector.broadcast %cst_97 : f32 to vector<1x128xf32>
    %404 = arith.subf %403, %401 : vector<1x128xf32>
    %405 = arith.select %402, %404, %401 : vector<1x128xi1>, vector<1x128xf32>
    %cst_98 = arith.constant 0.000000e+00 : f32
    %406 = vector.broadcast %cst_98 : f32 to vector<1x128xf32>
    %407 = arith.cmpf olt, %312, %406 : vector<1x128xf32>
    %cst_99 = arith.constant 3.14159274 : f32
    %408 = vector.broadcast %cst_99 : f32 to vector<1x128xf32>
    %409 = arith.subf %408, %405 : vector<1x128xf32>
    %410 = arith.select %407, %409, %405 : vector<1x128xi1>, vector<1x128xf32>
    %cst_100 = arith.constant 0.000000e+00 : f32
    %411 = vector.broadcast %cst_100 : f32 to vector<1x128xf32>
    %412 = arith.cmpf olt, %368, %411 : vector<1x128xf32>
    %cst_101 = arith.constant 0.000000e+00 : f32
    %413 = vector.broadcast %cst_101 : f32 to vector<1x128xf32>
    %414 = arith.subf %413, %410 : vector<1x128xf32>
    %415 = arith.select %412, %414, %410 : vector<1x128xi1>, vector<1x128xf32>
    %cst_102 = arith.constant 0.000000e+00 : f32
    %416 = vector.broadcast %cst_102 : f32 to vector<1x128xf32>
    %417 = vector.broadcast %27 : f32 to vector<1x128xf32>
    %418 = arith.addf %416, %417 : vector<1x128xf32>
    %419 = vector.broadcast %9 : f32 to vector<1x128xf32>
    %420 = arith.mulf %365, %419 : vector<1x128xf32>
    %421 = vector.broadcast %15 : f32 to vector<1x128xf32>
    %422 = arith.addf %420, %421 : vector<1x128xf32>
    %cst_103 = arith.constant 0.000000e+00 : f32
    %423 = vector.broadcast %cst_103 : f32 to vector<1x128xf32>
    %424 = arith.maximumf %422, %423 : vector<1x128xf32>
    %425 = vector.broadcast %21 : f32 to vector<1x128xf32>
    %426 = arith.mulf %424, %425 : vector<1x128xf32>
    %427 = arith.addf %418, %426 : vector<1x128xf32>
    %428 = vector.broadcast %10 : f32 to vector<1x128xf32>
    %429 = arith.mulf %365, %428 : vector<1x128xf32>
    %430 = vector.broadcast %16 : f32 to vector<1x128xf32>
    %431 = arith.addf %429, %430 : vector<1x128xf32>
    %cst_104 = arith.constant 0.000000e+00 : f32
    %432 = vector.broadcast %cst_104 : f32 to vector<1x128xf32>
    %433 = arith.maximumf %431, %432 : vector<1x128xf32>
    %434 = vector.broadcast %22 : f32 to vector<1x128xf32>
    %435 = arith.mulf %433, %434 : vector<1x128xf32>
    %436 = arith.addf %427, %435 : vector<1x128xf32>
    %437 = vector.broadcast %11 : f32 to vector<1x128xf32>
    %438 = arith.mulf %365, %437 : vector<1x128xf32>
    %439 = vector.broadcast %17 : f32 to vector<1x128xf32>
    %440 = arith.addf %438, %439 : vector<1x128xf32>
    %cst_105 = arith.constant 0.000000e+00 : f32
    %441 = vector.broadcast %cst_105 : f32 to vector<1x128xf32>
    %442 = arith.maximumf %440, %441 : vector<1x128xf32>
    %443 = vector.broadcast %23 : f32 to vector<1x128xf32>
    %444 = arith.mulf %442, %443 : vector<1x128xf32>
    %445 = arith.addf %436, %444 : vector<1x128xf32>
    %446 = vector.broadcast %12 : f32 to vector<1x128xf32>
    %447 = arith.mulf %365, %446 : vector<1x128xf32>
    %448 = vector.broadcast %18 : f32 to vector<1x128xf32>
    %449 = arith.addf %447, %448 : vector<1x128xf32>
    %cst_106 = arith.constant 0.000000e+00 : f32
    %450 = vector.broadcast %cst_106 : f32 to vector<1x128xf32>
    %451 = arith.maximumf %449, %450 : vector<1x128xf32>
    %452 = vector.broadcast %24 : f32 to vector<1x128xf32>
    %453 = arith.mulf %451, %452 : vector<1x128xf32>
    %454 = arith.addf %445, %453 : vector<1x128xf32>
    %455 = vector.broadcast %13 : f32 to vector<1x128xf32>
    %456 = arith.mulf %365, %455 : vector<1x128xf32>
    %457 = vector.broadcast %19 : f32 to vector<1x128xf32>
    %458 = arith.addf %456, %457 : vector<1x128xf32>
    %cst_107 = arith.constant 0.000000e+00 : f32
    %459 = vector.broadcast %cst_107 : f32 to vector<1x128xf32>
    %460 = arith.maximumf %458, %459 : vector<1x128xf32>
    %461 = vector.broadcast %25 : f32 to vector<1x128xf32>
    %462 = arith.mulf %460, %461 : vector<1x128xf32>
    %463 = arith.addf %454, %462 : vector<1x128xf32>
    %464 = vector.broadcast %14 : f32 to vector<1x128xf32>
    %465 = arith.mulf %365, %464 : vector<1x128xf32>
    %466 = vector.broadcast %20 : f32 to vector<1x128xf32>
    %467 = arith.addf %465, %466 : vector<1x128xf32>
    %cst_108 = arith.constant 0.000000e+00 : f32
    %468 = vector.broadcast %cst_108 : f32 to vector<1x128xf32>
    %469 = arith.maximumf %467, %468 : vector<1x128xf32>
    %470 = vector.broadcast %26 : f32 to vector<1x128xf32>
    %471 = arith.mulf %469, %470 : vector<1x128xf32>
    %472 = arith.addf %463, %471 : vector<1x128xf32>
    %cst_109 = arith.constant 0.000000e+00 : f32
    %473 = vector.broadcast %cst_109 : f32 to vector<1x128xf32>
    %474 = vector.broadcast %46 : f32 to vector<1x128xf32>
    %475 = arith.addf %473, %474 : vector<1x128xf32>
    %476 = vector.broadcast %28 : f32 to vector<1x128xf32>
    %477 = arith.mulf %415, %476 : vector<1x128xf32>
    %478 = vector.broadcast %34 : f32 to vector<1x128xf32>
    %479 = arith.addf %477, %478 : vector<1x128xf32>
    %cst_110 = arith.constant 0.000000e+00 : f32
    %480 = vector.broadcast %cst_110 : f32 to vector<1x128xf32>
    %481 = arith.maximumf %479, %480 : vector<1x128xf32>
    %482 = vector.broadcast %40 : f32 to vector<1x128xf32>
    %483 = arith.mulf %481, %482 : vector<1x128xf32>
    %484 = arith.addf %475, %483 : vector<1x128xf32>
    %485 = vector.broadcast %29 : f32 to vector<1x128xf32>
    %486 = arith.mulf %415, %485 : vector<1x128xf32>
    %487 = vector.broadcast %35 : f32 to vector<1x128xf32>
    %488 = arith.addf %486, %487 : vector<1x128xf32>
    %cst_111 = arith.constant 0.000000e+00 : f32
    %489 = vector.broadcast %cst_111 : f32 to vector<1x128xf32>
    %490 = arith.maximumf %488, %489 : vector<1x128xf32>
    %491 = vector.broadcast %41 : f32 to vector<1x128xf32>
    %492 = arith.mulf %490, %491 : vector<1x128xf32>
    %493 = arith.addf %484, %492 : vector<1x128xf32>
    %494 = vector.broadcast %30 : f32 to vector<1x128xf32>
    %495 = arith.mulf %415, %494 : vector<1x128xf32>
    %496 = vector.broadcast %36 : f32 to vector<1x128xf32>
    %497 = arith.addf %495, %496 : vector<1x128xf32>
    %cst_112 = arith.constant 0.000000e+00 : f32
    %498 = vector.broadcast %cst_112 : f32 to vector<1x128xf32>
    %499 = arith.maximumf %497, %498 : vector<1x128xf32>
    %500 = vector.broadcast %42 : f32 to vector<1x128xf32>
    %501 = arith.mulf %499, %500 : vector<1x128xf32>
    %502 = arith.addf %493, %501 : vector<1x128xf32>
    %503 = vector.broadcast %31 : f32 to vector<1x128xf32>
    %504 = arith.mulf %415, %503 : vector<1x128xf32>
    %505 = vector.broadcast %37 : f32 to vector<1x128xf32>
    %506 = arith.addf %504, %505 : vector<1x128xf32>
    %cst_113 = arith.constant 0.000000e+00 : f32
    %507 = vector.broadcast %cst_113 : f32 to vector<1x128xf32>
    %508 = arith.maximumf %506, %507 : vector<1x128xf32>
    %509 = vector.broadcast %43 : f32 to vector<1x128xf32>
    %510 = arith.mulf %508, %509 : vector<1x128xf32>
    %511 = arith.addf %502, %510 : vector<1x128xf32>
    %512 = vector.broadcast %32 : f32 to vector<1x128xf32>
    %513 = arith.mulf %415, %512 : vector<1x128xf32>
    %514 = vector.broadcast %38 : f32 to vector<1x128xf32>
    %515 = arith.addf %513, %514 : vector<1x128xf32>
    %cst_114 = arith.constant 0.000000e+00 : f32
    %516 = vector.broadcast %cst_114 : f32 to vector<1x128xf32>
    %517 = arith.maximumf %515, %516 : vector<1x128xf32>
    %518 = vector.broadcast %44 : f32 to vector<1x128xf32>
    %519 = arith.mulf %517, %518 : vector<1x128xf32>
    %520 = arith.addf %511, %519 : vector<1x128xf32>
    %521 = vector.broadcast %33 : f32 to vector<1x128xf32>
    %522 = arith.mulf %415, %521 : vector<1x128xf32>
    %523 = vector.broadcast %39 : f32 to vector<1x128xf32>
    %524 = arith.addf %522, %523 : vector<1x128xf32>
    %cst_115 = arith.constant 0.000000e+00 : f32
    %525 = vector.broadcast %cst_115 : f32 to vector<1x128xf32>
    %526 = arith.maximumf %524, %525 : vector<1x128xf32>
    %527 = vector.broadcast %45 : f32 to vector<1x128xf32>
    %528 = arith.mulf %526, %527 : vector<1x128xf32>
    %529 = arith.addf %520, %528 : vector<1x128xf32>
    %530 = arith.mulf %312, %312 : vector<1x128xf32>
    %531 = vector.broadcast %47 : f32 to vector<1x128xf32>
    %532 = arith.mulf %531, %530 : vector<1x128xf32>
    %533 = vector.broadcast %48 : f32 to vector<1x128xf32>
    %534 = arith.addf %532, %533 : vector<1x128xf32>
    %cst_116 = arith.constant 5.450000e-02 : f32
    %535 = vector.broadcast %cst_116 : f32 to vector<1x128xf32>
    %536 = arith.mulf %535, %312 : vector<1x128xf32>
    %cst_117 = arith.constant 2.870000e-01 : f32
    %537 = vector.broadcast %cst_117 : f32 to vector<1x128xf32>
    %538 = arith.subf %537, %536 : vector<1x128xf32>
    %539 = arith.mulf %538, %0 : vector<1x128xf32>
    %540 = arith.addf %539, %534 : vector<1x128xf32>
    %541 = arith.mulf %472, %5 : vector<1x128xf32>
    %542 = arith.subf %540, %541 : vector<1x128xf32>
    %cst_118 = arith.constant 4.100000e-02 : f32
    %543 = vector.broadcast %cst_118 : f32 to vector<1x128xf32>
    %544 = arith.mulf %543, %313 : vector<1x128xf32>
    %545 = arith.mulf %544, %314 : vector<1x128xf32>
    %546 = arith.addf %542, %545 : vector<1x128xf32>
    %cst_119 = arith.constant 24.3902435 : f32
    %547 = vector.broadcast %cst_119 : f32 to vector<1x128xf32>
    %548 = arith.mulf %546, %547 : vector<1x128xf32>
    %549 = arith.mulf %472, %6 : vector<1x128xf32>
    %550 = arith.addf %529, %549 : vector<1x128xf32>
    %cst_120 = arith.constant 4.100000e-02 : f32
    %551 = vector.broadcast %cst_120 : f32 to vector<1x128xf32>
    %552 = arith.mulf %551, %312 : vector<1x128xf32>
    %553 = arith.mulf %552, %314 : vector<1x128xf32>
    %554 = arith.subf %550, %553 : vector<1x128xf32>
    %cst_121 = arith.constant 24.3902435 : f32
    %555 = vector.broadcast %cst_121 : f32 to vector<1x128xf32>
    %556 = arith.mulf %554, %555 : vector<1x128xf32>
    %557 = arith.mulf %472, %8 : vector<1x128xf32>
    %cst_122 = arith.constant 3.300000e-02 : f32
    %558 = vector.broadcast %cst_122 : f32 to vector<1x128xf32>
    %559 = arith.mulf %529, %558 : vector<1x128xf32>
    %560 = arith.subf %557, %559 : vector<1x128xf32>
    %cst_123 = arith.constant 35971.2227 : f32
    %561 = vector.broadcast %cst_123 : f32 to vector<1x128xf32>
    %562 = arith.mulf %560, %561 : vector<1x128xf32>
    %cst_124 = arith.constant 0.00999999977 : f32
    %563 = vector.broadcast %cst_124 : f32 to vector<1x128xf32>
    %564 = arith.mulf %548, %563 : vector<1x128xf32>
    %565 = arith.addf %305, %564 : vector<1x128xf32>
    %cst_125 = arith.constant 0.00999999977 : f32
    %566 = vector.broadcast %cst_125 : f32 to vector<1x128xf32>
    %567 = arith.mulf %556, %566 : vector<1x128xf32>
    %568 = arith.addf %308, %567 : vector<1x128xf32>
    %cst_126 = arith.constant 0.00999999977 : f32
    %569 = vector.broadcast %cst_126 : f32 to vector<1x128xf32>
    %570 = arith.mulf %562, %569 : vector<1x128xf32>
    %571 = arith.addf %311, %570 : vector<1x128xf32>
    %572 = tpu.concatenate %565, %568, %571 in 0 : vector<1x128xf32>, vector<1x128xf32>, vector<1x128xf32> -> vector<3x128xf32>
    %c0_127 = arith.constant 0 : index
    %c0_128 = arith.constant 0 : index
    %573 = vector.load %arg3[%c0_127, %c0_128] : memref<3x128xf32, #tpu.memory_space<vmem>>, vector<3x128xf32>
    tpu.vector_store %arg3[%c0_127, %c0_128], %572 {strides = array<i32>} : memref<3x128xf32, #tpu.memory_space<vmem>>, vector<3x128xf32>,
    return
  }
  func.func @transform_0(%arg0: i32) -> i32 {
    %c0_i32 = arith.constant 0 : i32
    %c0_i32_0 = arith.constant 0 : i32
    return %c0_i32 : i32
  }
  func.func @transform_1(%arg0: i32) -> (i32, i32) {
    %c0_i32 = arith.constant 0 : i32
    %c0_i32_0 = arith.constant 0 : i32
    return %c0_i32, %arg0 : i32, i32
  }
  func.func @transform_2(%arg0: i32) -> (i32, i32) {
    %c0_i32 = arith.constant 0 : i32
    %c0_i32_0 = arith.constant 0 : i32
    return %c0_i32, %arg0 : i32, i32
  }
}

</mosaic_0001>

<llo_original>
// kernel: tpu_custom_call.1
$region0: #{tpu_custom_call.1}
  #allocation0 [shape = 'u32[]', space=smem, size = 0x4, offset = 0x4, fixed_abs, tag = 'smem constant byte address 0x4 - core index']
  #allocation1 [shape = 'u32[144,128]{1,0:T(1,128)}', space=vmem, size = 0x12000, scoped, tag = 'internal scratch']
  %s0 = inlined_call_operand.hbm [shape: f32[40], index: 0, kind: input, shape index: {}]
  %s1 = inlined_call_operand.hbm [shape: f32[6,128], index: 1, kind: input, shape index: {}]
  %s2 = inlined_call_operand.hbm [shape: f32[3,128], index: 2, kind: output, shape index: {}]
  %s3 = sld [smem:[#allocation0]]
  $region26: #{tpu_custom_call.1} parent=0
    _
  %s5 = ssub.s32 1, %s3
  %s6 = scalar_select 0, %s5, %s3
  $region1: #{tpu_custom_call.1} parent=0
    #allocation2 [shape = 'u8[512]{0}', space=smem, size = 0x200, scoped, tag = 'input window, operand 0, single buffered']
    #allocation3 [shape = 's32[1]{0}', space=sflag, size = 0x4, scoped, tag = 'scoped memory for tpu_custom_call.1']
    #allocation4 [shape = 's32[1]{0}', space=sflag, size = 0x4, scoped, tag = 'scoped memory for tpu_custom_call.1']
    #allocation5 [shape = 's32[1]{0}', space=sflag, size = 0x4, scoped, tag = 'scoped memory for tpu_custom_call.1']
    #allocation6 [shape = 'u8[4096]{0}', space=vmem, size = 0x1000, scoped, tag = 'input window, operand 1, single buffered']
    #allocation7 [shape = 'u8[2048]{0}', space=vmem, size = 0x800, scoped, tag = 'output window, operand 0, single buffered']
    %7 = vsyncpa [#allocation5], 0
    %8 = vsyncpa [#allocation3], 0
    %9 = vsyncpa [#allocation4], 0
    // Predicated region
    $region2: #{tpu_custom_call.1} parent=1 // pred_check
      _
    $region3: #{tpu_custom_call.1} parent=1 // pred_check_branch
      %11 = sbr.rel (0) target = $region5
    $region4: #{tpu_custom_call.1} parent=1 // pred_region
      %s13 = ssub.s32 16, 16
      %14 = vsyncadd [#allocation5], %s13
      %17 = dma.hbm_to_smem %s0, 16, [#allocation2], [#allocation5]
    $region5: #{tpu_custom_call.1} parent=1 // pred_fallthru
      _
    // Predicated region
    $region6: #{tpu_custom_call.1} parent=1 // pred_check
      _
    $region7: #{tpu_custom_call.1} parent=1 // pred_check_branch
      %19 = sbr.rel (0) target = $region9
    $region8: #{tpu_custom_call.1} parent=1 // pred_region
      %s21 = ssub.s32 128, 128
      %22 = vsyncadd [#allocation3], %s21
      %s24 = sshll.u32 [#allocation6], 4
      %s25 = int_to_ptr.vmem [resolvable:$true] %s24
      %27 = dma.hbm_to_vmem [thread:$0]  %s1, 128, %s25, [#allocation3]
    $region9: #{tpu_custom_call.1} parent=1 // pred_fallthru
      _
    // Predicated region
    $region10: #{tpu_custom_call.1} parent=1 // pred_check
      _
    $region11: #{tpu_custom_call.1} parent=1 // pred_check_branch
      %29 = sbr.rel (0) target = $region13
    $region12: #{tpu_custom_call.1} parent=1 // pred_region
      %30 = dma.done [#allocation5], 16
    $region13: #{tpu_custom_call.1} parent=1 // pred_fallthru
      _
    // Predicated region
    $region14: #{tpu_custom_call.1} parent=1 // pred_check
      _
    $region15: #{tpu_custom_call.1} parent=1 // pred_check_branch
      %32 = sbr.rel (0) target = $region17
    $region16: #{tpu_custom_call.1} parent=1 // pred_region
      %33 = dma.done [#allocation3], 128
    $region17: #{tpu_custom_call.1} parent=1 // pred_fallthru
      _
    %34 = sfence
    %v35 = vld [vmem:[#allocation6] sm:$0x1]
    %v36 = vld [vmem:[#allocation6 + $0x2] sm:$0x1]
    %v37 = vld [vmem:[#allocation6 + $0x3] sm:$0x1]
    %v38 = vld [vmem:[#allocation6 + $0x4] sm:$0x1]
    %v39 = vld [vmem:[#allocation6 + $0x5] sm:$0x1]
    %v40 = vand.u32 2147483647, %v36
    %vm41 = vcmp.le.f32.partialorder %v40, 0.7853982
    %vm42 = vcmp.lt.s32.totalorder %v36, 0
    %v43 = vand.u32 %v36, 2139095040
    %v44 = vshrl.u32 %v43, 23
    %v45 = vsub.s32 %v44, 127
    %v46 = vand.u32 2147483647, %v36
    %v47 = vand.u32 %v46, 8388607
    %v48 = vor.u32 %v47, 8388608
    %v49 = vsub.s32 0, %v48
    %v50 = vadd.s32 %v45, 1
    %vm51 = vcmp.gt.s32.totalorder %v50, 0
    %v52 = vsel %vm51, %v50, 0
    %v53 = vshrl.u32 %v52, 5
    %v54 = vand.u32 %v52, 31
    %v55 = vsub.s32 32, %v54
    %v56 = vshrl.u32 683565275, %v55
    %v57 = vshll.u32 683565275, %v54
    %v58 = vshrl.u32 2475754826, %v55
    %v59 = vor.u32 %v57, %v58
    %v60 = vshll.u32 2475754826, %v54
    %v61 = vshrl.u32 2131351028, %v55
    %v62 = vor.u32 %v60, %v61
    %v63 = vshll.u32 2131351028, %v54
    %v64 = vshrl.u32 2102212464, %v55
    %v65 = vor.u32 %v63, %v64
    %v66 = vshll.u32 2102212464, %v54
    %v67 = vshrl.u32 920167782, %v55
    %v68 = vor.u32 %v66, %v67
    %v69 = vshll.u32 920167782, %v54
    %v70 = vshrl.u32 1326507024, %v55
    %v71 = vor.u32 %v69, %v70
    %vm72 = vcmp.lt.s32.totalorder %v53, 1
    %vm73 = vcmp.lt.s32.totalorder %v53, 2
    %vm74 = vcmp.lt.s32.totalorder %v53, 3
    %vm75 = vcmp.lt.s32.totalorder %v53, 4
    %v76 = vsel %vm72, %v56, %v59
    %v77 = vsel %vm75, %v65, 2102212464
    %v78 = vsel %vm74, %v62, %v77
    %v79 = vsel %vm73, %v76, %v78
    %v80 = vsel %vm72, %v59, %v62
    %v81 = vsel %vm75, %v68, 920167782
    %v82 = vsel %vm74, %v65, %v81
    %v83 = vsel %vm73, %v80, %v82
    %v84 = vsel %vm72, %v62, %v65
    %v85 = vsel %vm75, %v71, 1326507024
    %v86 = vsel %vm74, %v68, %v85
    %v87 = vsel %vm73, %v84, %v86
    %v88 = vshll.u32 %v48, 8
    %v89 = vmul.u32.u64.compose %v88, %v87
    %v90 = vextract.low.u32 %v89
    %v91 = vextract.high.u32 %v89
    %v92 = vmul.u32.u64.compose %v88, %v83
    %v93 = vextract.low.u32 %v92
    %v94 = vextract.high.u32 %v92
    %v95 = vmul.u32 %v88, %v79
    %v96 = vadd.s32 %v91, %v93
    %vm97 = vc.u32 %v91, %v93
    %v98 = vadd.s32 %v94, 1
    %v99 = vsel %vm97, %v98, %v94
    %v100 = vadd.s32 %v95, %v99
    %v101 = vadd.s32 %v100, 536870912
    %v102 = vshrl.u32 %v101, 30
    %v103 = vshll.u32 %v102, 30
    %v104 = vsub.s32 %v100, %v103
    %vm105 = vcmp.lt.s32.totalorder %v104, 0
    %v106 = vsub.s32 0, %v104
    %v107 = vsel %vm105, %v106, %v104
    %v108 = vclz %v107
    %v109 = vsub.s32 %v108, 2
    %vm110 = vcmp.gt.s32.totalorder 0, %v109
    %v111 = vsel %vm110, 0, %v109
    %v112 = vsub.s32 32, %v111
    %v113 = vshll.u32 %v104, %v111
    %v114 = vshrl.u32 %v96, %v112
    %v115 = vor.u32 %v113, %v114
    %v116 = vsub.s32 4294967266, %v111
    %v117 = vadd.s32 %v116, 127
    %v118 = vshll.u32 %v117, 23
    %v119 = vor.u32 4788187, %v118
    %v120 = vand.u32 2147483647, %v119
    %v122 = vcvt.s32.f32 %v115
    %v123 = vmul.f32 %v122, %v120
    %v124 = vxor.u32 %v123, 2147483648
    %v125 = vsel %vm42, %v124, %v123
    %v126 = vsub.s32 4, %v102
    %v127 = vsel %vm42, %v126, %v102
    %v128 = vsel %vm41, %v36, %v125
    %v129 = vsel %vm41, 0, %v127
    %v130 = vcosq.f32.pop %v128
    %v131 = vsinq.f32.pop %v128
    %vm132 = vweird.f32 %v36
    %v133 = vadd.s32 %v129, 3
    %v134 = vand.u32 %v133, 3
    %vm135 = vcmp.lt.s32.totalorder %v134, 2
    %vm136 = vcmp.eq.s32.totalorder %v134, 0
    %v137 = vxor.u32 %v131, 2147483648
    %v138 = vsel %vm136, %v130, %v137
    %vm139 = vcmp.eq.s32.totalorder %v134, 2
    %v140 = vxor.u32 %v130, 2147483648
    %v141 = vsel %vm139, %v140, %v131
    %v142 = vsel %vm135, %v138, %v141
    %v143 = vsel %vm132, nan, %v142
    %v144 = vand.u32 2147483647, %v36
    %vm145 = vcmp.le.f32.partialorder %v144, 0.7853982
    %vm146 = vcmp.lt.s32.totalorder %v36, 0
    %v147 = vand.u32 %v36, 2139095040
    %v148 = vshrl.u32 %v147, 23
    %v149 = vsub.s32 %v148, 127
    %v150 = vand.u32 2147483647, %v36
    %v151 = vand.u32 %v150, 8388607
    %v152 = vor.u32 %v151, 8388608
    %v153 = vsub.s32 0, %v152
    %v154 = vadd.s32 %v149, 1
    %vm155 = vcmp.gt.s32.totalorder %v154, 0
    %v156 = vsel %vm155, %v154, 0
    %v157 = vshrl.u32 %v156, 5
    %v158 = vand.u32 %v156, 31
    %v159 = vsub.s32 32, %v158
    %v160 = vshrl.u32 683565275, %v159
    %v161 = vshll.u32 683565275, %v158
    %v162 = vshrl.u32 2475754826, %v159
    %v163 = vor.u32 %v161, %v162
    %v164 = vshll.u32 2475754826, %v158
    %v165 = vshrl.u32 2131351028, %v159
    %v166 = vor.u32 %v164, %v165
    %v167 = vshll.u32 2131351028, %v158
    %v168 = vshrl.u32 2102212464, %v159
    %v169 = vor.u32 %v167, %v168
    %v170 = vshll.u32 2102212464, %v158
    %v171 = vshrl.u32 920167782, %v159
    %v172 = vor.u32 %v170, %v171
    %v173 = vshll.u32 920167782, %v158
    %v174 = vshrl.u32 1326507024, %v159
    %v175 = vor.u32 %v173, %v174
    %vm176 = vcmp.lt.s32.totalorder %v157, 1
    %vm177 = vcmp.lt.s32.totalorder %v157, 2
    %vm178 = vcmp.lt.s32.totalorder %v157, 3
    %vm179 = vcmp.lt.s32.totalorder %v157, 4
    %v180 = vsel %vm176, %v160, %v163
    %v181 = vsel %vm179, %v169, 2102212464
    %v182 = vsel %vm178, %v166, %v181
    %v183 = vsel %vm177, %v180, %v182
    %v184 = vsel %vm176, %v163, %v166
    %v185 = vsel %vm179, %v172, 920167782
    %v186 = vsel %vm178, %v169, %v185
    %v187 = vsel %vm177, %v184, %v186
    %v188 = vsel %vm176, %v166, %v169
    %v189 = vsel %vm179, %v175, 1326507024
    %v190 = vsel %vm178, %v172, %v189
    %v191 = vsel %vm177, %v188, %v190
    %v192 = vshll.u32 %v152, 8
    %v193 = vmul.u32.u64.compose %v192, %v191
    %v194 = vextract.low.u32 %v193
    %v195 = vextract.high.u32 %v193
    %v196 = vmul.u32.u64.compose %v192, %v187
    %v197 = vextract.low.u32 %v196
    %v198 = vextract.high.u32 %v196
    %v199 = vmul.u32 %v192, %v183
    %v200 = vadd.s32 %v195, %v197
    %vm201 = vc.u32 %v195, %v197
    %v202 = vadd.s32 %v198, 1
    %v203 = vsel %vm201, %v202, %v198
    %v204 = vadd.s32 %v199, %v203
    %v205 = vadd.s32 %v204, 536870912
    %v206 = vshrl.u32 %v205, 30
    %v207 = vshll.u32 %v206, 30
    %v208 = vsub.s32 %v204, %v207
    %vm209 = vcmp.lt.s32.totalorder %v208, 0
    %v210 = vsub.s32 0, %v208
    %v211 = vsel %vm209, %v210, %v208
    %v212 = vclz %v211
    %v213 = vsub.s32 %v212, 2
    %vm214 = vcmp.gt.s32.totalorder 0, %v213
    %v215 = vsel %vm214, 0, %v213
    %v216 = vsub.s32 32, %v215
    %v217 = vshll.u32 %v208, %v215
    %v218 = vshrl.u32 %v200, %v216
    %v219 = vor.u32 %v217, %v218
    %v220 = vsub.s32 4294967266, %v215
    %v221 = vadd.s32 %v220, 127
    %v222 = vshll.u32 %v221, 23
    %v223 = vor.u32 4788187, %v222
    %v224 = vand.u32 2147483647, %v223
    %v226 = vcvt.s32.f32 %v219
    %v227 = vmul.f32 %v226, %v224
    %v228 = vxor.u32 %v227, 2147483648
    %v229 = vsel %vm146, %v228, %v227
    %v230 = vsub.s32 4, %v206
    %v231 = vsel %vm146, %v230, %v206
    %v232 = vsel %vm145, %v36, %v229
    %v233 = vsel %vm145, 0, %v231
    %v234 = vcosq.f32.pop %v232
    %v235 = vsinq.f32.pop %v232
    %vm236 = vweird.f32 %v36
    %v237 = vand.u32 %v233, 3
    %vm238 = vcmp.lt.s32.totalorder %v237, 2
    %vm239 = vcmp.eq.s32.totalorder %v237, 0
    %v240 = vxor.u32 %v235, 2147483648
    %v241 = vsel %vm239, %v234, %v240
    %vm242 = vcmp.eq.s32.totalorder %v237, 2
    %v243 = vxor.u32 %v234, 2147483648
    %v244 = vsel %vm242, %v243, %v235
    %v245 = vsel %vm238, %v241, %v244
    %v246 = vsel %vm236, nan, %v245
    %v247 = vmul.f32 %v246, 0.029
    %s248 = sld [smem:[#allocation2]]
    %s249 = sld [smem:[#allocation2 + $0x1]]
    %s250 = sld [smem:[#allocation2 + $0x2]]
    %s251 = sld [smem:[#allocation2 + $0x3]]
    %s252 = sld [smem:[#allocation2 + $0x4]]
    %s253 = sld [smem:[#allocation2 + $0x5]]
    %s254 = sld [smem:[#allocation2 + $0x6]]
    %s255 = sld [smem:[#allocation2 + $0x7]]
    %s256 = sld [smem:[#allocation2 + $0x8]]
    %s257 = sld [smem:[#allocation2 + $0x9]]
    %s258 = sld [smem:[#allocation2 + $0xa]]
    %s259 = sld [smem:[#allocation2 + $0xb]]
    %s260 = sld [smem:[#allocation2 + $0xc]]
    %s261 = sld [smem:[#allocation2 + $0xd]]
    %s262 = sld [smem:[#allocation2 + $0xe]]
    %s263 = sld [smem:[#allocation2 + $0xf]]
    %s264 = sld [smem:[#allocation2 + $0x10]]
    %s265 = sld [smem:[#allocation2 + $0x11]]
    %s266 = sld [smem:[#allocation2 + $0x12]]
    %s267 = sld [smem:[#allocation2 + $0x13]]
    %s268 = sld [smem:[#allocation2 + $0x14]]
    %s269 = sld [smem:[#allocation2 + $0x15]]
    %s270 = sld [smem:[#allocation2 + $0x16]]
    %s271 = sld [smem:[#allocation2 + $0x17]]
    %s272 = sld [smem:[#allocation2 + $0x18]]
    %s273 = sld [smem:[#allocation2 + $0x19]]
    %s274 = sld [smem:[#allocation2 + $0x1a]]
    %s275 = sld [smem:[#allocation2 + $0x1b]]
    %s276 = sld [smem:[#allocation2 + $0x1c]]
    %s277 = sld [smem:[#allocation2 + $0x1d]]
    %s278 = sld [smem:[#allocation2 + $0x1e]]
    %s279 = sld [smem:[#allocation2 + $0x1f]]
    %s280 = sld [smem:[#allocation2 + $0x20]]
    %s281 = sld [smem:[#allocation2 + $0x21]]
    %s282 = sld [smem:[#allocation2 + $0x22]]
    %s283 = sld [smem:[#allocation2 + $0x23]]
    %s284 = sld [smem:[#allocation2 + $0x24]]
    %s285 = sld [smem:[#allocation2 + $0x25]]
    %s286 = sld [smem:[#allocation2 + $0x26]]
    %s287 = sld [smem:[#allocation2 + $0x27]]
    %v288 = vadd.f32 %v37, 0.0
    %v289 = vadd.f32 %v38, 0.0
    %v290 = vadd.f32 %v39, 0.0
    %v291 = vmul.f32 %v290, 0.029
    %v292 = vadd.f32 %v291, %v289
    %v293 = vand.u32 2147483647, %v288
    %v294 = vand.u32 2147483647, %v292
    %v295 = vmax.f32 %v293, %v294
    %v296 = vmin.f32 %v293, %v294
    %vm297 = vcmp.eq.f32.partialorder %v295, 0.0
    %v298 = vsel %vm297, 1.0, %v295
    %v299 = vrcp.pop %v298
    %v300 = vmul.f32 %v296, %v299
    %v301 = vmul.f32 %v300, %v300
    %v302 = vmul.f32 %v301, -0.004054058
    %v303 = vadd.f32 %v302, 0.02186123
    %v304 = vmul.f32 %v303, %v301
    %v305 = vsub.f32 %v304, 0.055909887
    %v306 = vmul.f32 %v305, %v301
    %v307 = vadd.f32 %v306, 0.09642004
    %v308 = vmul.f32 %v307, %v301
    %v309 = vsub.f32 %v308, 0.13908534
    %v310 = vmul.f32 %v309, %v301
    %v311 = vadd.f32 %v310, 0.19946536
    %v312 = vmul.f32 %v311, %v301
    %v313 = vsub.f32 %v312, 0.33329856
    %v314 = vmul.f32 %v313, %v301
    %v315 = vadd.f32 %v314, 0.99999934
    %v316 = vmul.f32 %v315, %v300
    %vm317 = vcmp.gt.f32.partialorder %v294, %v293
    %v318 = vsub.f32 1.5707964, %v316
    %v319 = vsel %vm317, %v318, %v316
    %vm320 = vcmp.lt.f32.partialorder %v288, 0.0
    %v321 = vsub.f32 3.1415927, %v319
    %v322 = vsel %vm320, %v321, %v319
    %vm323 = vcmp.lt.f32.partialorder %v292, 0.0
    %v324 = vsub.f32 0.0, %v322
    %v325 = vsel %vm323, %v324, %v322
    %v326 = vsub.f32 %v36, %v325
    %v327 = vmul.f32 %v290, 0.033
    %v328 = vsub.f32 %v327, %v289
    %v329 = vand.u32 2147483647, %v328
    %v330 = vmax.f32 %v293, %v329
    %v331 = vmin.f32 %v293, %v329
    %vm332 = vcmp.eq.f32.partialorder %v330, 0.0
    %v333 = vsel %vm332, 1.0, %v330
    %v334 = vrcp.pop %v333
    %v335 = vmul.f32 %v331, %v334
    %v336 = vmul.f32 %v335, %v335
    %v337 = vmul.f32 %v336, -0.004054058
    %v338 = vadd.f32 %v337, 0.02186123
    %v339 = vmul.f32 %v338, %v336
    %v340 = vsub.f32 %v339, 0.055909887
    %v341 = vmul.f32 %v340, %v336
    %v342 = vadd.f32 %v341, 0.09642004
    %v343 = vmul.f32 %v342, %v336
    %v344 = vsub.f32 %v343, 0.13908534
    %v345 = vmul.f32 %v344, %v336
    %v346 = vadd.f32 %v345, 0.19946536
    %v347 = vmul.f32 %v346, %v336
    %v348 = vsub.f32 %v347, 0.33329856
    %v349 = vmul.f32 %v348, %v336
    %v350 = vadd.f32 %v349, 0.99999934
    %v351 = vmul.f32 %v350, %v335
    %vm352 = vcmp.gt.f32.partialorder %v329, %v293
    %v353 = vsub.f32 1.5707964, %v351
    %v354 = vsel %vm352, %v353, %v351
    %v355 = vsub.f32 3.1415927, %v354
    %v356 = vsel %vm320, %v355, %v354
    %vm357 = vcmp.lt.f32.partialorder %v328, 0.0
    %v358 = vsub.f32 0.0, %v356
    %v359 = vsel %vm357, %v358, %v356
    %v360 = vstv %s266
    %v361 = vadd.f32 %v360, 0.0
    %v362 = vstv %s248
    %v363 = vmul.f32 %v326, %v362
    %v364 = vstv %s254
    %v365 = vadd.f32 %v363, %v364
    %v366 = vmax.f32 %v365, 0.0
    %v367 = vstv %s260
    %v368 = vmul.f32 %v366, %v367
    %v369 = vadd.f32 %v361, %v368
    %v370 = vstv %s249
    %v371 = vmul.f32 %v326, %v370
    %v372 = vstv %s255
    %v373 = vadd.f32 %v371, %v372
    %v374 = vmax.f32 %v373, 0.0
    %v375 = vstv %s261
    %v376 = vmul.f32 %v374, %v375
    %v377 = vadd.f32 %v369, %v376
    %v378 = vstv %s250
    %v379 = vmul.f32 %v326, %v378
    %v380 = vstv %s256
    %v381 = vadd.f32 %v379, %v380
    %v382 = vmax.f32 %v381, 0.0
    %v383 = vstv %s262
    %v384 = vmul.f32 %v382, %v383
    %v385 = vadd.f32 %v377, %v384
    %v386 = vstv %s251
    %v387 = vmul.f32 %v326, %v386
    %v388 = vstv %s257
    %v389 = vadd.f32 %v387, %v388
    %v390 = vmax.f32 %v389, 0.0
    %v391 = vstv %s263
    %v392 = vmul.f32 %v390, %v391
    %v393 = vadd.f32 %v385, %v392
    %v394 = vstv %s252
    %v395 = vmul.f32 %v326, %v394
    %v396 = vstv %s258
    %v397 = vadd.f32 %v395, %v396
    %v398 = vmax.f32 %v397, 0.0
    %v399 = vstv %s264
    %v400 = vmul.f32 %v398, %v399
    %v401 = vadd.f32 %v393, %v400
    %v402 = vstv %s253
    %v403 = vmul.f32 %v326, %v402
    %v404 = vstv %s259
    %v405 = vadd.f32 %v403, %v404
    %v406 = vmax.f32 %v405, 0.0
    %v407 = vstv %s265
    %v408 = vmul.f32 %v406, %v407
    %v409 = vadd.f32 %v401, %v408
    %v410 = vstv %s285
    %v411 = vadd.f32 %v410, 0.0
    %v412 = vstv %s267
    %v413 = vmul.f32 %v359, %v412
    %v414 = vstv %s273
    %v415 = vadd.f32 %v413, %v414
    %v416 = vmax.f32 %v415, 0.0
    %v417 = vstv %s279
    %v418 = vmul.f32 %v416, %v417
    %v419 = vadd.f32 %v411, %v418
    %v420 = vstv %s268
    %v421 = vmul.f32 %v359, %v420
    %v422 = vstv %s274
    %v423 = vadd.f32 %v421, %v422
    %v424 = vmax.f32 %v423, 0.0
    %v425 = vstv %s280
    %v426 = vmul.f32 %v424, %v425
    %v427 = vadd.f32 %v419, %v426
    %v428 = vstv %s269
    %v429 = vmul.f32 %v359, %v428
    %v430 = vstv %s275
    %v431 = vadd.f32 %v429, %v430
    %v432 = vmax.f32 %v431, 0.0
    %v433 = vstv %s281
    %v434 = vmul.f32 %v432, %v433
    %v435 = vadd.f32 %v427, %v434
    %v436 = vstv %s270
    %v437 = vmul.f32 %v359, %v436
    %v438 = vstv %s276
    %v439 = vadd.f32 %v437, %v438
    %v440 = vmax.f32 %v439, 0.0
    %v441 = vstv %s282
    %v442 = vmul.f32 %v440, %v441
    %v443 = vadd.f32 %v435, %v442
    %v444 = vstv %s271
    %v445 = vmul.f32 %v359, %v444
    %v446 = vstv %s277
    %v447 = vadd.f32 %v445, %v446
    %v448 = vmax.f32 %v447, 0.0
    %v449 = vstv %s283
    %v450 = vmul.f32 %v448, %v449
    %v451 = vadd.f32 %v443, %v450
    %v452 = vstv %s272
    %v453 = vmul.f32 %v359, %v452
    %v454 = vstv %s278
    %v455 = vadd.f32 %v453, %v454
    %v456 = vmax.f32 %v455, 0.0
    %v457 = vstv %s284
    %v458 = vmul.f32 %v456, %v457
    %v459 = vadd.f32 %v451, %v458
    %v460 = vmul.f32 %v288, %v288
    %v461 = vstv %s286
    %v462 = vmul.f32 %v461, %v460
    %v463 = vstv %s287
    %v464 = vadd.f32 %v462, %v463
    %v465 = vmul.f32 %v288, 0.0545
    %v466 = vsub.f32 0.287, %v465
    %v467 = vmul.f32 %v466, %v35
    %v468 = vadd.f32 %v467, %v464
    %v469 = vmul.f32 %v409, %v143
    %v470 = vsub.f32 %v468, %v469
    %v471 = vmul.f32 %v289, 0.041
    %v472 = vmul.f32 %v471, %v290
    %v473 = vadd.f32 %v470, %v472
    %v474 = vmul.f32 %v473, 24.390244
    %v475 = vmul.f32 %v409, %v246
    %v476 = vadd.f32 %v459, %v475
    %v477 = vmul.f32 %v288, 0.041
    %v478 = vmul.f32 %v477, %v290
    %v479 = vsub.f32 %v476, %v478
    %v480 = vmul.f32 %v479, 24.390244
    %v481 = vmul.f32 %v409, %v247
    %v482 = vmul.f32 %v459, 0.033
    %v483 = vsub.f32 %v481, %v482
    %v484 = vmul.f32 %v483, 35971.223
    %v485 = vmul.f32 %v474, 0.01
    %v486 = vadd.f32 %v485, 0.0
    %v487 = vmul.f32 %v480, 0.01
    %v488 = vadd.f32 %v487, 0.0
    %v489 = vmul.f32 %v484, 0.01
    %v490 = vadd.f32 %v489, 0.0
    %v491 = vadd.f32 %v37, %v486
    %v492 = vadd.f32 %v38, %v488
    %v493 = vadd.f32 %v39, %v490
    %v494 = vmul.f32 %v493, 0.029
    %v495 = vadd.f32 %v494, %v492
    %v496 = vand.u32 2147483647, %v491
    %v497 = vand.u32 2147483647, %v495
    %v498 = vmax.f32 %v496, %v497
    %v499 = vmin.f32 %v496, %v497
    %vm500 = vcmp.eq.f32.partialorder %v498, 0.0
    %v501 = vsel %vm500, 1.0, %v498
    %v502 = vrcp.pop %v501
    %v503 = vmul.f32 %v499, %v502
    %v504 = vmul.f32 %v503, %v503
    %v505 = vmul.f32 %v504, -0.004054058
    %v506 = vadd.f32 %v505, 0.02186123
    %v507 = vmul.f32 %v506, %v504
    %v508 = vsub.f32 %v507, 0.055909887
    %v509 = vmul.f32 %v508, %v504
    %v510 = vadd.f32 %v509, 0.09642004
    %v511 = vmul.f32 %v510, %v504
    %v512 = vsub.f32 %v511, 0.13908534
    %v513 = vmul.f32 %v512, %v504
    %v514 = vadd.f32 %v513, 0.19946536
    %v515 = vmul.f32 %v514, %v504
    %v516 = vsub.f32 %v515, 0.33329856
    %v517 = vmul.f32 %v516, %v504
    %v518 = vadd.f32 %v517, 0.99999934
    %v519 = vmul.f32 %v518, %v503
    %vm520 = vcmp.gt.f32.partialorder %v497, %v496
    %v521 = vsub.f32 1.5707964, %v519
    %v522 = vsel %vm520, %v521, %v519
    %vm523 = vcmp.lt.f32.partialorder %v491, 0.0
    %v524 = vsub.f32 3.1415927, %v522
    %v525 = vsel %vm523, %v524, %v522
    %vm526 = vcmp.lt.f32.partialorder %v495, 0.0
    %v527 = vsub.f32 0.0, %v525
    %v528 = vsel %vm526, %v527, %v525
    %v529 = vsub.f32 %v36, %v528
    %v530 = vmul.f32 %v493, 0.033
    %v531 = vsub.f32 %v530, %v492
    %v532 = vand.u32 2147483647, %v531
    %v533 = vmax.f32 %v496, %v532
    %v534 = vmin.f32 %v496, %v532
    %vm535 = vcmp.eq.f32.partialorder %v533, 0.0
    %v536 = vsel %vm535, 1.0, %v533
    %v537 = vrcp.pop %v536
    %v538 = vmul.f32 %v534, %v537
    %v539 = vmul.f32 %v538, %v538
    %v540 = vmul.f32 %v539, -0.004054058
    %v541 = vadd.f32 %v540, 0.02186123
    %v542 = vmul.f32 %v541, %v539
    %v543 = vsub.f32 %v542, 0.055909887
    %v544 = vmul.f32 %v543, %v539
    %v545 = vadd.f32 %v544, 0.09642004
    %v546 = vmul.f32 %v545, %v539
    %v547 = vsub.f32 %v546, 0.13908534
    %v548 = vmul.f32 %v547, %v539
    %v549 = vadd.f32 %v548, 0.19946536
    %v550 = vmul.f32 %v549, %v539
    %v551 = vsub.f32 %v550, 0.33329856
    %v552 = vmul.f32 %v551, %v539
    %v553 = vadd.f32 %v552, 0.99999934
    %v554 = vmul.f32 %v553, %v538
    %vm555 = vcmp.gt.f32.partialorder %v532, %v496
    %v556 = vsub.f32 1.5707964, %v554
    %v557 = vsel %vm555, %v556, %v554
    %v558 = vsub.f32 3.1415927, %v557
    %v559 = vsel %vm523, %v558, %v557
    %vm560 = vcmp.lt.f32.partialorder %v531, 0.0
    %v561 = vsub.f32 0.0, %v559
    %v562 = vsel %vm560, %v561, %v559
    %v563 = vmul.f32 %v529, %v362
    %v564 = vadd.f32 %v563, %v364
    %v565 = vmax.f32 %v564, 0.0
    %v566 = vmul.f32 %v565, %v367
    %v567 = vadd.f32 %v361, %v566
    %v568 = vmul.f32 %v529, %v370
    %v569 = vadd.f32 %v568, %v372
    %v570 = vmax.f32 %v569, 0.0
    %v571 = vmul.f32 %v570, %v375
    %v572 = vadd.f32 %v567, %v571
    %v573 = vmul.f32 %v529, %v378
    %v574 = vadd.f32 %v573, %v380
    %v575 = vmax.f32 %v574, 0.0
    %v576 = vmul.f32 %v575, %v383
    %v577 = vadd.f32 %v572, %v576
    %v578 = vmul.f32 %v529, %v386
    %v579 = vadd.f32 %v578, %v388
    %v580 = vmax.f32 %v579, 0.0
    %v581 = vmul.f32 %v580, %v391
    %v582 = vadd.f32 %v577, %v581
    %v583 = vmul.f32 %v529, %v394
    %v584 = vadd.f32 %v583, %v396
    %v585 = vmax.f32 %v584, 0.0
    %v586 = vmul.f32 %v585, %v399
    %v587 = vadd.f32 %v582, %v586
    %v588 = vmul.f32 %v529, %v402
    %v589 = vadd.f32 %v588, %v404
    %v590 = vmax.f32 %v589, 0.0
    %v591 = vmul.f32 %v590, %v407
    %v592 = vadd.f32 %v587, %v591
    %v593 = vmul.f32 %v562, %v412
    %v594 = vadd.f32 %v593, %v414
    %v595 = vmax.f32 %v594, 0.0
    %v596 = vmul.f32 %v595, %v417
    %v597 = vadd.f32 %v411, %v596
    %v598 = vmul.f32 %v562, %v420
    %v599 = vadd.f32 %v598, %v422
    %v600 = vmax.f32 %v599, 0.0
    %v601 = vmul.f32 %v600, %v425
    %v602 = vadd.f32 %v597, %v601
    %v603 = vmul.f32 %v562, %v428
    %v604 = vadd.f32 %v603, %v430
    %v605 = vmax.f32 %v604, 0.0
    %v606 = vmul.f32 %v605, %v433
    %v607 = vadd.f32 %v602, %v606
    %v608 = vmul.f32 %v562, %v436
    %v609 = vadd.f32 %v608, %v438
    %v610 = vmax.f32 %v609, 0.0
    %v611 = vmul.f32 %v610, %v441
    %v612 = vadd.f32 %v607, %v611
    %v613 = vmul.f32 %v562, %v444
    %v614 = vadd.f32 %v613, %v446
    %v615 = vmax.f32 %v614, 0.0
    %v616 = vmul.f32 %v615, %v449
    %v617 = vadd.f32 %v612, %v616
    %v618 = vmul.f32 %v562, %v452
    %v619 = vadd.f32 %v618, %v454
    %v620 = vmax.f32 %v619, 0.0
    %v621 = vmul.f32 %v620, %v457
    %v622 = vadd.f32 %v617, %v621
    %v623 = vmul.f32 %v491, %v491
    %v624 = vmul.f32 %v461, %v623
    %v625 = vadd.f32 %v624, %v463
    %v626 = vmul.f32 %v491, 0.0545
    %v627 = vsub.f32 0.287, %v626
    %v628 = vmul.f32 %v627, %v35
    %v629 = vadd.f32 %v628, %v625
    %v630 = vmul.f32 %v592, %v143
    %v631 = vsub.f32 %v629, %v630
    %v632 = vmul.f32 %v492, 0.041
    %v633 = vmul.f32 %v632, %v493
    %v634 = vadd.f32 %v631, %v633
    %v635 = vmul.f32 %v634, 24.390244
    %v636 = vmul.f32 %v592, %v246
    %v637 = vadd.f32 %v622, %v636
    %v638 = vmul.f32 %v491, 0.041
    %v639 = vmul.f32 %v638, %v493
    %v640 = vsub.f32 %v637, %v639
    %v641 = vmul.f32 %v640, 24.390244
    %v642 = vmul.f32 %v592, %v247
    %v643 = vmul.f32 %v622, 0.033
    %v644 = vsub.f32 %v642, %v643
    %v645 = vmul.f32 %v644, 35971.223
    %v646 = vmul.f32 %v635, 0.01
    %v647 = vadd.f32 %v486, %v646
    %v648 = vmul.f32 %v641, 0.01
    %v649 = vadd.f32 %v488, %v648
    %v650 = vmul.f32 %v645, 0.01
    %v651 = vadd.f32 %v490, %v650
    %v653 = vrot.slane %v649, 7
    %v656 = vrot.slane %v651, 6
    %vm658 = vcmask 1040384
    %v659 = vsel %vm658, %v647, %v653
    %vm660 = vcmask 1041408
    %v661 = vsel %vm660, %v659, %v656
    %662 = vst [vmem:[#allocation7] sm:$0x7] %v661
    // Predicated region
    $region18: #{tpu_custom_call.1} parent=1 // pred_check
      _
    $region19: #{tpu_custom_call.1} parent=1 // pred_check_branch
      %664 = sbr.rel (0) target = $region21
    $region20: #{tpu_custom_call.1} parent=1 // pred_region
      %s666 = ssub.s32 64, 64
      %667 = vsyncadd [#allocation4], %s666
      %s669 = sshll.u32 [#allocation7], 4
      %s670 = int_to_ptr.vmem [resolvable:$true] %s669
      %672 = dma.vmem_to_hbm [thread:$0]  %s670, 64, %s2, [#allocation4]
    $region21: #{tpu_custom_call.1} parent=1 // pred_fallthru
      _
    // Predicated region
    $region22: #{tpu_custom_call.1} parent=1 // pred_check
      _
    $region23: #{tpu_custom_call.1} parent=1 // pred_check_branch
      %674 = sbr.rel (0) target = $region25
    $region24: #{tpu_custom_call.1} parent=1 // pred_region
      %675 = dma.done [#allocation4], 64
    $region25: #{tpu_custom_call.1} parent=1 // pred_fallthru
      _
    %676 = vsyncpa [#allocation3], 1
    %677 = vsyncpa [#allocation4], 1
    %678 = vsyncpa [#allocation5], 1

</llo_original>
